<compile_context>
chip_gen: v7x
topology: tpu7x:2x2x1
jax: 0.10.0
libtpu: 0.0.40
codegen_flags: <defaults>
</compile_context>

<pallas_src>
import jax
import jax.numpy as jnp
from jax.experimental import pallas as pl
from jax.experimental.pallas import tpu as pltpu


_VMEM_LIMIT_BYTES = 32 * 1024 * 1024   # <= scoped/physical VMEM on v5e/v6e/v7x


# ----------------------------- Pallas kernels --------------------------------

def _project_kernel(x_ref, w2_ref, b2_ref, h_ref, v_ref, xt_ref):
    """Fused projection prologue, per (batch, seq-tile).

    x_ref  : (1, C, ts)  f32   channels-major input tile
    w2_ref : (2C, C)     bf16  [ M ; Wv ]  with  M = Wk^T Wq
    b2_ref : (2C, 1)     f32   [ Wk^T bq ; bv ]
    h_ref  : (1, C, ts)  bf16  out: h = M x + Wk^T bq
    v_ref  : (1, C, ts)  bf16  out: v = Wv x + bv
    xt_ref : (1, ts, C)  bf16  out: x^T (token-major keys)
    """
    C = h_ref.shape[1]
    x = x_ref[0]                                                   # (C, ts) f32
    # One wide matmul for both projections (MXU), f32 accumulation.
    y = (jnp.dot(w2_ref[...], x.astype(jnp.bfloat16),
                 preferred_element_type=jnp.float32) + b2_ref[...])  # (2C, ts)
    h_ref[0] = y[:C].astype(jnp.bfloat16)
    v_ref[0] = y[C:].astype(jnp.bfloat16)
    # Token-major bf16 copy of x so the score matmul in the attention kernel
    # is a plain NN matmul (no in-kernel transposes of the big key slab).
    xt_ref[0] = jnp.transpose(x).astype(jnp.bfloat16)


def _attn_kernel(h_ref, xt_ref, v_ref, xq_ref, alpha_ref, o_ref):
    """Attention + fused residual epilogue, per (batch, query-tile).

    h_ref    : (1, C, tq)  bf16  h = Wk^T q for this query tile
    xt_ref   : (1, S, C)   bf16  token-major keys, whole batch (VMEM resident)
    v_ref    : (1, C, S)   bf16  channels-major values, whole batch (resident)
    xq_ref   : (1, C, tq)  f32   residual x tile
    alpha_ref: (1,)        f32   scalar, SMEM
    o_ref    : (1, C, tq)  f32
    """
    # scores s[j, i] = x_j . h_i  (softmax over j equals the reference: the
    # dropped q_i . bk term is constant in j).  Contraction over full C.
    s = jnp.dot(xt_ref[0], h_ref[0], preferred_element_type=jnp.float32)  # (S, tq)
    s_max = jnp.max(s, axis=0, keepdims=True)                             # (1, tq)
    p = jnp.exp(s - s_max)                                                # (S, tq)
    denom = jnp.sum(p, axis=0, keepdims=True)                             # (1, tq)
    out = jnp.dot(v_ref[0], p.astype(jnp.bfloat16),
                  preferred_element_type=jnp.float32)                     # (C, tq)
    out = out * pl.reciprocal(denom, approx=False)
    # Fused epilogue: alpha * out + x, lane-dense (C, tq) store.
    o_ref[0] = (alpha_ref[0] * out + xq_ref[0]).astype(o_ref.dtype)


# ----------------------------- tiling helpers ---------------------------------

def _pick_seq_tile(s):
    """Largest of {128, 256, 512} dividing s, else the full extent."""
    tile = s
    for cand in (128, 256, 512):
        if s % cand == 0:
            tile = cand
    return tile


def _pick_query_tile(s, b):
    """Query tile: prefer 128/256, keep b * (s // tile) >= 2 for v7x megacore."""
    tile = s
    for cand in (128, 256):
        if s % cand == 0 and b * (s // cand) >= 2:
            tile = cand
    return tile


# ----------------------------- wrapper -----------------------------------------

@jax.jit
def self_attention_forward(x, wq, bq, wk, bk, wv, bv, alpha):
    """SelfAttention forward.

    x:  (B, C, H, W) f32 (NCHW, PyTorch convention)
    wq, wk: (C//8, C)  -- squeezed Conv2d(C, C//8, 1) weights (out, in)
    wv:     (C, C)     -- squeezed Conv2d(C, C, 1) weight
    bq, bk: (C//8,), bv: (C,), alpha: scalar
    """
    B, C, H, W = x.shape
    S = H * W
    x3 = x.reshape(B, C, S)        # channels-major token layout: pure reshape

    # Fold q/k projections into a single C x C matrix (softmax shift-invariance)
    # and fuse it with the value projection into one wide weight matrix.
    m_mat = wk.T @ wq                                   # (C, C)  = Wk^T Wq
    m_bias = wk.T @ bq                                  # (C,)    = Wk^T bq
    w2 = jnp.concatenate([m_mat, wv], axis=0).astype(jnp.bfloat16)            # (2C, C)
    b2 = jnp.concatenate([m_bias, bv], axis=0).reshape(2 * C, 1).astype(jnp.float32)

    # ---- prologue: projections (once per element of x) ----------------------
    ts = _pick_seq_tile(S)
    h_arr, v_arr, xt_arr = pl.pallas_call(
        _project_kernel,
        out_shape=(jax.ShapeDtypeStruct((B, C, S), jnp.bfloat16),
                   jax.ShapeDtypeStruct((B, C, S), jnp.bfloat16),
                   jax.ShapeDtypeStruct((B, S, C), jnp.bfloat16)),
        grid_spec=pltpu.PrefetchScalarGridSpec(
            num_scalar_prefetch=0,
            grid=(B, S // ts),
            in_specs=[
                pl.BlockSpec((1, C, ts), lambda b, si: (b, 0, si)),   # x tile
                pl.BlockSpec((2 * C, C), lambda b, si: (0, 0)),       # [M ; Wv] bf16
                pl.BlockSpec((2 * C, 1), lambda b, si: (0, 0)),       # [m0 ; bv]
            ],
            out_specs=(
                pl.BlockSpec((1, C, ts), lambda b, si: (b, 0, si)),   # h
                pl.BlockSpec((1, C, ts), lambda b, si: (b, 0, si)),   # v
                pl.BlockSpec((1, ts, C), lambda b, si: (b, si, 0)),   # x^T
            )),
        compiler_params=pltpu.CompilerParams(
            dimension_semantics=("parallel", "parallel"),
            vmem_limit_bytes=_VMEM_LIMIT_BYTES),
    )(x3, w2, b2)

    # ---- attention + residual ------------------------------------------------
    tq = _pick_query_tile(S, B)
    out3 = pl.pallas_call(
        _attn_kernel,
        out_shape=jax.ShapeDtypeStruct((B, C, S), jnp.float32),
        grid_spec=pltpu.PrefetchScalarGridSpec(
            num_scalar_prefetch=0,
            grid=(B, S // tq),
            in_specs=[
                pl.BlockSpec((1, C, tq), lambda b, qi: (b, 0, qi)),   # h tile
                pl.BlockSpec((1, S, C), lambda b, qi: (b, 0, 0)),     # keys slab (resident)
                pl.BlockSpec((1, C, S), lambda b, qi: (b, 0, 0)),     # values slab (resident)
                pl.BlockSpec((1, C, tq), lambda b, qi: (b, 0, qi)),   # residual x tile
                pl.BlockSpec(memory_space=pltpu.MemorySpace.SMEM),    # alpha scalar
            ],
            out_specs=pl.BlockSpec((1, C, tq), lambda b, qi: (b, 0, qi))),
        compiler_params=pltpu.CompilerParams(
            dimension_semantics=("parallel", "parallel"),
            vmem_limit_bytes=_VMEM_LIMIT_BYTES),
    )(h_arr, xt_arr, v_arr, x3, jnp.reshape(alpha, (1,)).astype(jnp.float32))

    return out3.reshape(B, C, H, W)


# ----------------------------- pure-JAX reference ------------------------------

def self_attention_reference(x, wq, bq, wk, bk, wv, bv, alpha):
    B, C, H, W = x.shape
    S = H * W
    xf = x.reshape(B, C, S).astype(jnp.float32)
    q = jnp.einsum('oc,bcs->bos', wq, xf) + bq[None, :, None]     # (B, Cq, S)
    k = jnp.einsum('oc,bcs->bos', wk, xf) + bk[None, :, None]     # (B, Cq, S)
    v = jnp.einsum('oc,bcs->bos', wv, xf) + bv[None, :, None]     # (B, C, S)
    attn = jax.nn.softmax(jnp.einsum('bci,bcj->bij', q, k), axis=-1)
    out = jnp.einsum('bcj,bij->bci', v, attn).reshape(B, C, H, W)
    return alpha * out + x


# ----------------------------- demo ---------------------------------------------

if __name__ == "__main__":
    key = jax.random.PRNGKey(0)
    kx, kwq, kwk, kwv, kbq, kbk, kbv = jax.random.split(key, 7)

    B, C, H, W = 2, 32, 16, 16            # in_channels=32 -> q/k width C//8 = 4
    Cq = C // 8

    x = jax.random.normal(kx, (B, C, H, W), jnp.float32)
    wq = 0.05 * jax.random.normal(kwq, (Cq, C), jnp.float32)   # Conv2d(C, C//8, 1)
    wk = 0.05 * jax.random.normal(kwk, (Cq, C), jnp.float32)   # Conv2d(C, C//8, 1)
    wv = 0.05 * jax.random.normal(kwv, (C, C), jnp.float32)    # Conv2d(C, C, 1)
    bq = 0.05 * jax.random.normal(kbq, (Cq,), jnp.float32)
    bk = 0.05 * jax.random.normal(kbk, (Cq,), jnp.float32)
    bv = 0.05 * jax.random.normal(kbv, (C,), jnp.float32)
    # The PyTorch module initializes alpha = 0; use a nonzero value so the demo
    # exercises the full attention + residual path (forward semantics identical).
    alpha = jnp.float32(0.5)

    out = jax.block_until_ready(
        self_attention_forward(x, wq, bq, wk, bk, wv, bv, alpha))

    ref = self_attention_reference(x, wq, bq, wk, bk, wv, bv, alpha)
    err = float(jnp.max(jnp.abs(out - ref)))

    assert out.shape == (B, C, H, W), out.shape
    assert bool(jnp.all(jnp.isfinite(out)))
    assert err < 5e-2, f"max abs err vs reference: {err}"
    print("KERNEL_OK")
</pallas_src>

<mosaic_0001>
module attributes {stable_mosaic.version = 11 : i64} {
  func.func @_project_kernel(%arg0: i32, %arg1: i32, %arg2: memref<1x32x256xf32, #tpu.memory_space<vmem>>, %arg3: memref<64x32xbf16, #tpu.memory_space<vmem>>, %arg4: memref<64x1xf32, #tpu.memory_space<vmem>>, %arg5: memref<1x32x256xbf16, #tpu.memory_space<vmem>>, %arg6: memref<1x32x256xbf16, #tpu.memory_space<vmem>>, %arg7: memref<1x256x32xbf16, #tpu.memory_space<vmem>>) attributes {dimension_semantics = [#tpu.dimension_semantics<parallel>, #tpu.dimension_semantics<parallel>], iteration_bounds = array<i64: 2, 1>, scalar_prefetch = 0 : i64, scratch_operands = 0 : i64, tpu.core_type = #tpu.core_type<tc>, window_params = [{transform_indices = @transform_0, window_bounds = array<i64: 1, 32, 256>}, {pipeline_mode = #tpu.pipeline_mode<synchronous>, transform_indices = @transform_1, window_bounds = array<i64: 64, 32>}, {pipeline_mode = #tpu.pipeline_mode<synchronous>, transform_indices = @transform_2, window_bounds = array<i64: 64, 1>}, {transform_indices = @transform_3, window_bounds = array<i64: 1, 32, 256>}, {transform_indices = @transform_4, window_bounds = array<i64: 1, 32, 256>}, {transform_indices = @transform_5, window_bounds = array<i64: 1, 256, 32>}]} {
    %c0 = arith.constant 0 : index
    %c0_0 = arith.constant 0 : index
    %c0_1 = arith.constant 0 : index
    %0 = vector.load %arg2[%c0, %c0_0, %c0_1] : memref<1x32x256xf32, #tpu.memory_space<vmem>>, vector<1x32x256xf32>
    %1 = vector.shape_cast %0 : vector<1x32x256xf32> to vector<32x256xf32>
    %c0_2 = arith.constant 0 : index
    %c0_3 = arith.constant 0 : index
    %2 = vector.load %arg3[%c0_2, %c0_3] : memref<64x32xbf16, #tpu.memory_space<vmem>>, vector<64x32xbf16>
    %3 = arith.truncf %1 : vector<32x256xf32> to vector<32x256xbf16>
    %cst = arith.constant dense<0.000000e+00> : vector<64x256xf32>
    %4 = tpu.matmul %2, %3, %cst {dimension_numbers = #tpu.dot_dimension_numbers<[1], [0], [0], [1], [0, 0, 1, 1], [], []>} : vector<64x32xbf16>, vector<32x256xbf16>, vector<64x256xf32> -> vector<64x256xf32>
    %c0_4 = arith.constant 0 : index
    %c0_5 = arith.constant 0 : index
    %5 = vector.load %arg4[%c0_4, %c0_5] : memref<64x1xf32, #tpu.memory_space<vmem>>, vector<64x1xf32>
    %6 = vector.broadcast %5 : vector<64x1xf32> to vector<64x256xf32>
    %7 = arith.addf %4, %6 : vector<64x256xf32>
    %8 = vector.extract_strided_slice %7 {offsets = [0, 0], sizes = [32, 256], strides = [1, 1]} : vector<64x256xf32> to vector<32x256xf32>
    %9 = arith.truncf %8 : vector<32x256xf32> to vector<32x256xbf16>
    %c0_6 = arith.constant 0 : index
    %c0_7 = arith.constant 0 : index
    %c0_8 = arith.constant 0 : index
    %10 = vector.load %arg5[%c0_6, %c0_7, %c0_8] : memref<1x32x256xbf16, #tpu.memory_space<vmem>>, vector<1x32x256xbf16>
    %11 = vector.shape_cast %10 : vector<1x32x256xbf16> to vector<32x256xbf16>
    %12 = vector.shape_cast %9 : vector<32x256xbf16> to vector<1x32x256xbf16>
    tpu.vector_store %arg5[%c0_6, %c0_7, %c0_8], %12 {strides = array<i32>} : memref<1x32x256xbf16, #tpu.memory_space<vmem>>, vector<1x32x256xbf16>,
    %13 = vector.extract_strided_slice %7 {offsets = [32, 0], sizes = [32, 256], strides = [1, 1]} : vector<64x256xf32> to vector<32x256xf32>
    %14 = arith.truncf %13 : vector<32x256xf32> to vector<32x256xbf16>
    %c0_9 = arith.constant 0 : index
    %c0_10 = arith.constant 0 : index
    %c0_11 = arith.constant 0 : index
    %15 = vector.load %arg6[%c0_9, %c0_10, %c0_11] : memref<1x32x256xbf16, #tpu.memory_space<vmem>>, vector<1x32x256xbf16>
    %16 = vector.shape_cast %15 : vector<1x32x256xbf16> to vector<32x256xbf16>
    %17 = vector.shape_cast %14 : vector<32x256xbf16> to vector<1x32x256xbf16>
    tpu.vector_store %arg6[%c0_9, %c0_10, %c0_11], %17 {strides = array<i32>} : memref<1x32x256xbf16, #tpu.memory_space<vmem>>, vector<1x32x256xbf16>,
    %18 = tpu.transpose %1, [1, 0] : vector<32x256xf32> -> vector<256x32xf32>
    %19 = arith.truncf %18 : vector<256x32xf32> to vector<256x32xbf16>
    %c0_12 = arith.constant 0 : index
    %c0_13 = arith.constant 0 : index
    %c0_14 = arith.constant 0 : index
    %20 = vector.load %arg7[%c0_12, %c0_13, %c0_14] : memref<1x256x32xbf16, #tpu.memory_space<vmem>>, vector<1x256x32xbf16>
    %21 = vector.shape_cast %20 : vector<1x256x32xbf16> to vector<256x32xbf16>
    %22 = vector.shape_cast %19 : vector<256x32xbf16> to vector<1x256x32xbf16>
    tpu.vector_store %arg7[%c0_12, %c0_13, %c0_14], %22 {strides = array<i32>} : memref<1x256x32xbf16, #tpu.memory_space<vmem>>, vector<1x256x32xbf16>,
    return
  }
  func.func @transform_0(%arg0: i32, %arg1: i32) -> (i32, i32, i32) {
    %c0_i32 = arith.constant 0 : i32
    %c0_i32_0 = arith.constant 0 : i32
    return %arg0, %c0_i32, %arg1 : i32, i32, i32
  }
  func.func @transform_1(%arg0: i32, %arg1: i32) -> (i32, i32) {
    %c0_i32 = arith.constant 0 : i32
    %c0_i32_0 = arith.constant 0 : i32
    %c0_i32_1 = arith.constant 0 : i32
    return %c0_i32, %c0_i32_0 : i32, i32
  }
  func.func @transform_2(%arg0: i32, %arg1: i32) -> (i32, i32) {
    %c0_i32 = arith.constant 0 : i32
    %c0_i32_0 = arith.constant 0 : i32
    %c0_i32_1 = arith.constant 0 : i32
    return %c0_i32, %c0_i32_0 : i32, i32
  }
  func.func @transform_3(%arg0: i32, %arg1: i32) -> (i32, i32, i32) {
    %c0_i32 = arith.constant 0 : i32
    %c0_i32_0 = arith.constant 0 : i32
    return %arg0, %c0_i32, %arg1 : i32, i32, i32
  }
  func.func @transform_4(%arg0: i32, %arg1: i32) -> (i32, i32, i32) {
    %c0_i32 = arith.constant 0 : i32
    %c0_i32_0 = arith.constant 0 : i32
    return %arg0, %c0_i32, %arg1 : i32, i32, i32
  }
  func.func @transform_5(%arg0: i32, %arg1: i32) -> (i32, i32, i32) {
    %c0_i32 = arith.constant 0 : i32
    %c0_i32_0 = arith.constant 0 : i32
    return %arg0, %arg1, %c0_i32 : i32, i32, i32
  }
}

module attributes {stable_mosaic.version = 11 : i64} {
  func.func @_attn_kernel(%arg0: i32, %arg1: i32, %arg2: memref<1x32x256xbf16, #tpu.memory_space<vmem>>, %arg3: memref<1x256x32xbf16, #tpu.memory_space<vmem>>, %arg4: memref<1x32x256xbf16, #tpu.memory_space<vmem>>, %arg5: memref<1x32x256xf32, #tpu.memory_space<vmem>>, %arg6: memref<1xf32, #tpu.memory_space<smem>>, %arg7: memref<1x32x256xf32, #tpu.memory_space<vmem>>) attributes {dimension_semantics = [#tpu.dimension_semantics<parallel>, #tpu.dimension_semantics<parallel>], iteration_bounds = array<i64: 2, 1>, scalar_prefetch = 0 : i64, scratch_operands = 0 : i64, tpu.core_type = #tpu.core_type<tc>, window_params = [{transform_indices = @transform_0, window_bounds = array<i64: 1, 32, 256>}, {transform_indices = @transform_1, window_bounds = array<i64: 1, 256, 32>}, {transform_indices = @transform_2, window_bounds = array<i64: 1, 32, 256>}, {transform_indices = @transform_3, window_bounds = array<i64: 1, 32, 256>}, {transform_indices = @transform_4, window_bounds = array<i64: 1>}, {transform_indices = @transform_5, window_bounds = array<i64: 1, 32, 256>}]} {
    %c0 = arith.constant 0 : index
    %c0_0 = arith.constant 0 : index
    %c0_1 = arith.constant 0 : index
    %0 = vector.load %arg3[%c0, %c0_0, %c0_1] : memref<1x256x32xbf16, #tpu.memory_space<vmem>>, vector<1x256x32xbf16>
    %1 = vector.shape_cast %0 : vector<1x256x32xbf16> to vector<256x32xbf16>
    %c0_2 = arith.constant 0 : index
    %c0_3 = arith.constant 0 : index
    %c0_4 = arith.constant 0 : index
    %2 = vector.load %arg2[%c0_2, %c0_3, %c0_4] : memref<1x32x256xbf16, #tpu.memory_space<vmem>>, vector<1x32x256xbf16>
    %3 = vector.shape_cast %2 : vector<1x32x256xbf16> to vector<32x256xbf16>
    %cst = arith.constant dense<0.000000e+00> : vector<256x256xf32>
    %4 = tpu.matmul %1, %3, %cst {dimension_numbers = #tpu.dot_dimension_numbers<[1], [0], [0], [1], [0, 0, 1, 1], [], []>} : vector<256x32xbf16>, vector<32x256xbf16>, vector<256x256xf32> -> vector<256x256xf32>
    %cst_5 = arith.constant dense<0xFF800000> : vector<256xf32>
    %5 = vector.multi_reduction <maximumf>, %4, %cst_5 [0] : vector<256x256xf32> to vector<256xf32>
    %6 = vector.shape_cast %5 : vector<256xf32> to vector<1x256xf32>
    %7 = vector.broadcast %6 : vector<1x256xf32> to vector<256x256xf32>
    %8 = arith.subf %4, %7 : vector<256x256xf32>
    %9 = math.exp %8 : vector<256x256xf32>
    %cst_6 = arith.constant dense<0.000000e+00> : vector<256xf32>
    %10 = vector.multi_reduction <add>, %9, %cst_6 [0] : vector<256x256xf32> to vector<256xf32>
    %11 = vector.shape_cast %10 : vector<256xf32> to vector<1x256xf32>
    %c0_7 = arith.constant 0 : index
    %c0_8 = arith.constant 0 : index
    %c0_9 = arith.constant 0 : index
    %12 = vector.load %arg4[%c0_7, %c0_8, %c0_9] : memref<1x32x256xbf16, #tpu.memory_space<vmem>>, vector<1x32x256xbf16>
    %13 = vector.shape_cast %12 : vector<1x32x256xbf16> to vector<32x256xbf16>
    %14 = arith.truncf %9 : vector<256x256xf32> to vector<256x256xbf16>
    %cst_10 = arith.constant dense<0.000000e+00> : vector<32x256xf32>
    %15 = tpu.matmul %13, %14, %cst_10 {dimension_numbers = #tpu.dot_dimension_numbers<[1], [0], [0], [1], [0, 0, 1, 1], [], []>} : vector<32x256xbf16>, vector<256x256xbf16>, vector<32x256xf32> -> vector<32x256xf32>
    %16 = tpu.reciprocal %11 : vector<1x256xf32> -> vector<1x256xf32>
    %17 = vector.broadcast %16 : vector<1x256xf32> to vector<32x256xf32>
    %18 = arith.mulf %15, %17 : vector<32x256xf32>
    %c0_11 = arith.constant 0 : index
    %19 = memref.load %arg6[%c0_11] : memref<1xf32, #tpu.memory_space<smem>>
    %20 = vector.broadcast %19 : f32 to vector<32x256xf32>
    %21 = arith.mulf %20, %18 : vector<32x256xf32>
    %c0_12 = arith.constant 0 : index
    %c0_13 = arith.constant 0 : index
    %c0_14 = arith.constant 0 : index
    %22 = vector.load %arg5[%c0_12, %c0_13, %c0_14] : memref<1x32x256xf32, #tpu.memory_space<vmem>>, vector<1x32x256xf32>
    %23 = vector.shape_cast %22 : vector<1x32x256xf32> to vector<32x256xf32>
    %24 = arith.addf %21, %23 : vector<32x256xf32>
    %c0_15 = arith.constant 0 : index
    %c0_16 = arith.constant 0 : index
    %c0_17 = arith.constant 0 : index
    %25 = vector.load %arg7[%c0_15, %c0_16, %c0_17] : memref<1x32x256xf32, #tpu.memory_space<vmem>>, vector<1x32x256xf32>
    %26 = vector.shape_cast %25 : vector<1x32x256xf32> to vector<32x256xf32>
    %27 = vector.shape_cast %24 : vector<32x256xf32> to vector<1x32x256xf32>
    tpu.vector_store %arg7[%c0_15, %c0_16, %c0_17], %27 {strides = array<i32>} : memref<1x32x256xf32, #tpu.memory_space<vmem>>, vector<1x32x256xf32>,
    return
  }
  func.func @transform_0(%arg0: i32, %arg1: i32) -> (i32, i32, i32) {
    %c0_i32 = arith.constant 0 : i32
    %c0_i32_0 = arith.constant 0 : i32
    return %arg0, %c0_i32, %arg1 : i32, i32, i32
  }
  func.func @transform_1(%arg0: i32, %arg1: i32) -> (i32, i32, i32) {
    %c0_i32 = arith.constant 0 : i32
    %c0_i32_0 = arith.constant 0 : i32
    %c0_i32_1 = arith.constant 0 : i32
    return %arg0, %c0_i32, %c0_i32_0 : i32, i32, i32
  }
  func.func @transform_2(%arg0: i32, %arg1: i32) -> (i32, i32, i32) {
    %c0_i32 = arith.constant 0 : i32
    %c0_i32_0 = arith.constant 0 : i32
    %c0_i32_1 = arith.constant 0 : i32
    return %arg0, %c0_i32, %c0_i32_0 : i32, i32, i32
  }
  func.func @transform_3(%arg0: i32, %arg1: i32) -> (i32, i32, i32) {
    %c0_i32 = arith.constant 0 : i32
    %c0_i32_0 = arith.constant 0 : i32
    return %arg0, %c0_i32, %arg1 : i32, i32, i32
  }
  func.func @transform_4(%arg0: i32, %arg1: i32) -> i32 {
    %c0_i32 = arith.constant 0 : i32
    %c0_i32_0 = arith.constant 0 : i32
    return %c0_i32 : i32
  }
  func.func @transform_5(%arg0: i32, %arg1: i32) -> (i32, i32, i32) {
    %c0_i32 = arith.constant 0 : i32
    %c0_i32_0 = arith.constant 0 : i32
    return %arg0, %c0_i32, %arg1 : i32, i32, i32
  }
}

</mosaic_0001>

<llo_original>
// kernel: self_attention_forward.2
$region0: #{self_attention_forward.2}
  #allocation0 [shape = 'u32[]', space=smem, size = 0x4, offset = 0x4, fixed_abs, tag = 'smem constant byte address 0x4 - core index']
  #allocation1 [shape = 'u32[144,128]{1,0:T(1,128)}', space=vmem, size = 0x12000, scoped, tag = 'internal scratch']
  %s0 = inlined_call_operand.vmem [shape: f32[2,32,256], index: 0, kind: input, shape index: {}]
  %s1 = inlined_call_operand.vmem [shape: bf16[64,32], index: 1, kind: input, shape index: {}]
  %s2 = inlined_call_operand.vmem [shape: f32[64,1], index: 2, kind: input, shape index: {}]
  %s3 = inlined_call_operand.vmem [shape: bf16[2,32,256], index: 3, kind: output, shape index: {0}]
  %s4 = inlined_call_operand.vmem [shape: bf16[2,32,256], index: 4, kind: output, shape index: {1}]
  %s5 = inlined_call_operand.vmem [shape: bf16[2,256,32], index: 5, kind: output, shape index: {2}]
  %6 = xla_tuple %s3, %s4, %s5
  %s7 = sld [smem:[#allocation0]]
  $region61: #{self_attention_forward.2} parent=0
    _
  %s9 = ssub.s32 1, %s7
  %s10 = scalar_select 0, %s9, %s7
  loop: start=0, step=1, limit=4
  $region2: #{self_attention_forward.2} parent=0 // loop_pre_header
    _
  $region3: #{self_attention_forward.2} parent=0 // loop_header
    %s12 = sphi 0, %s16
    %p13 = scmp.ge.s32.totalorder %s12, 4
    %s19 = sphi 0, %s31
    %s20 = sphi 0, %s27
    %s21 = sphi 0, %s19
    %s22 = sphi 0, %s20
    %s23 = sphi 0, %s21
    %s24 = sphi 0, %s22
    %s36 = sphi 0, %s38
    %s39 = sphi 0, %s36
    %s40 = sphi 0, %s39
    %s56 = sphi 0, %s40
    %s60 = sphi 0, %s60
    %s62 = sphi 0, %s60
    %s63 = sphi 0, %s62
    %s77 = sphi 0, %s63
    %s81 = sphi 0, %s81
    %s83 = sphi 0, %s81
    %s84 = sphi 0, %s83
    %s98 = sphi 0, %s84
    %s106 = sphi 0, %s108
    %s109 = sphi 0, %s106
    %s110 = sphi 0, %s109
    %s126 = sphi 0, %s110
    %s134 = sphi 0, %s136
    %s137 = sphi 0, %s134
    %s138 = sphi 0, %s137
    %s154 = sphi 0, %s138
    %s162 = sphi 0, %s164
    %s165 = sphi 0, %s162
    %s166 = sphi 0, %s165
    %s182 = sphi 0, %s166
  $region4: #{self_attention_forward.2} parent=0 // loop_header_branch
    %15 = sbr.rel (%p13) target = $region8
  $region5: #{self_attention_forward.2} parent=0 // loop_body
    %s17 = ssub.s32 %s12, 1
    %s18 = ssub.s32 %s12, 2
    %s25 = sadd.s32 1, %s20
    %p26 = scmp.ge.s32.totalorder %s25, 1
    %s27 = scalar_select %p26, 0, %s25
    %s28 = sadd.s32 1, %s19
    %s29 = scalar_select %p26, %s28, %s19
    %p30 = scmp.ge.s32.totalorder %s29, 2
    %s31 = scalar_select %p30, 0, %s29
    %s32 = ssub.s32 %s19, %s31
    %s33 = ssub.s32 %s20, %s27
    %s34 = sor.u32 %s32, %s33
    %p35 = scmp.eq.s32.totalorder %s34, 0
    %s37 = sadd.s32 %s36, 1
    %s38 = scalar_select %p35, %s36, %s37
    %p41 = pneg %p35
    %p42 = scmp.eq.s32.totalorder %s12, 1
    %p43 = por %p41, %p42
    %p44 = scmp.ne.s32.totalorder %s36, %s39
    %p45 = scmp.eq.s32.totalorder %s12, 0
    %p46 = por %p44, %p45
    %p47 = scmp.ne.s32.totalorder %s36, %s39
    %p48 = scmp.eq.s32.totalorder %s17, 1
    %p49 = por %p47, %p48
    %p50 = scmp.ne.s32.totalorder %s39, %s40
    %p51 = scmp.eq.s32.totalorder %s17, 0
    %p52 = por %p50, %p51
    %p53 = scmp.ne.s32.totalorder %s39, %s40
    %p54 = scmp.eq.s32.totalorder %s18, 1
    %p55 = por %p53, %p54
    %p57 = scmp.ne.s32.totalorder %s40, %s56
    %p58 = scmp.eq.s32.totalorder %s18, 0
    %p59 = por %p57, %p58
    %s61 = sadd.s32 %s60, 1
    %p64 = scmp.eq.s32.totalorder %s12, 1
    %p65 = scmp.ne.s32.totalorder %s60, %s62
    %p66 = scmp.eq.s32.totalorder %s12, 0
    %p67 = por %p65, %p66
    %p68 = scmp.ne.s32.totalorder %s60, %s62
    %p69 = scmp.eq.s32.totalorder %s17, 1
    %p70 = por %p68, %p69
    %p71 = scmp.ne.s32.totalorder %s62, %s63
    %p72 = scmp.eq.s32.totalorder %s17, 0
    %p73 = por %p71, %p72
    %p74 = scmp.ne.s32.totalorder %s62, %s63
    %p75 = scmp.eq.s32.totalorder %s18, 1
    %p76 = por %p74, %p75
    %p78 = scmp.ne.s32.totalorder %s63, %s77
    %p79 = scmp.eq.s32.totalorder %s18, 0
    %p80 = por %p78, %p79
    %s82 = sadd.s32 %s81, 1
    %p85 = scmp.eq.s32.totalorder %s12, 1
    %p86 = scmp.ne.s32.totalorder %s81, %s83
    %p87 = scmp.eq.s32.totalorder %s12, 0
    %p88 = por %p86, %p87
    %p89 = scmp.ne.s32.totalorder %s81, %s83
    %p90 = scmp.eq.s32.totalorder %s17, 1
    %p91 = por %p89, %p90
    %p92 = scmp.ne.s32.totalorder %s83, %s84
    %p93 = scmp.eq.s32.totalorder %s17, 0
    %p94 = por %p92, %p93
    %p95 = scmp.ne.s32.totalorder %s83, %s84
    %p96 = scmp.eq.s32.totalorder %s18, 1
    %p97 = por %p95, %p96
    %p99 = scmp.ne.s32.totalorder %s84, %s98
    %p100 = scmp.eq.s32.totalorder %s18, 0
    %p101 = por %p99, %p100
    %s102 = ssub.s32 %s19, %s31
    %s103 = ssub.s32 %s20, %s27
    %s104 = sor.u32 %s102, %s103
    %p105 = scmp.eq.s32.totalorder %s104, 0
    %s107 = sadd.s32 %s106, 1
    %s108 = scalar_select %p105, %s106, %s107
    %p111 = pneg %p105
    %p112 = scmp.eq.s32.totalorder %s12, 1
    %p113 = por %p111, %p112
    %p114 = scmp.ne.s32.totalorder %s106, %s109
    %p115 = scmp.eq.s32.totalorder %s12, 0
    %p116 = por %p114, %p115
    %p117 = scmp.ne.s32.totalorder %s106, %s109
    %p118 = scmp.eq.s32.totalorder %s17, 1
    %p119 = por %p117, %p118
    %p120 = scmp.ne.s32.totalorder %s109, %s110
    %p121 = scmp.eq.s32.totalorder %s17, 0
    %p122 = por %p120, %p121
    %p123 = scmp.ne.s32.totalorder %s109, %s110
    %p124 = scmp.eq.s32.totalorder %s18, 1
    %p125 = por %p123, %p124
    %p127 = scmp.ne.s32.totalorder %s110, %s126
    %p128 = scmp.eq.s32.totalorder %s18, 0
    %p129 = por %p127, %p128
    %s130 = ssub.s32 %s19, %s31
    %s131 = ssub.s32 %s20, %s27
    %s132 = sor.u32 %s130, %s131
    %p133 = scmp.eq.s32.totalorder %s132, 0
    %s135 = sadd.s32 %s134, 1
    %s136 = scalar_select %p133, %s134, %s135
    %p139 = pneg %p133
    %p140 = scmp.eq.s32.totalorder %s12, 1
    %p141 = por %p139, %p140
    %p142 = scmp.ne.s32.totalorder %s134, %s137
    %p143 = scmp.eq.s32.totalorder %s12, 0
    %p144 = por %p142, %p143
    %p145 = scmp.ne.s32.totalorder %s134, %s137
    %p146 = scmp.eq.s32.totalorder %s17, 1
    %p147 = por %p145, %p146
    %p148 = scmp.ne.s32.totalorder %s137, %s138
    %p149 = scmp.eq.s32.totalorder %s17, 0
    %p150 = por %p148, %p149
    %p151 = scmp.ne.s32.totalorder %s137, %s138
    %p152 = scmp.eq.s32.totalorder %s18, 1
    %p153 = por %p151, %p152
    %p155 = scmp.ne.s32.totalorder %s138, %s154
    %p156 = scmp.eq.s32.totalorder %s18, 0
    %p157 = por %p155, %p156
    %s158 = ssub.s32 %s19, %s31
    %s159 = ssub.s32 %s20, %s27
    %s160 = sor.u32 %s158, %s159
    %p161 = scmp.eq.s32.totalorder %s160, 0
    %s163 = sadd.s32 %s162, 1
    %s164 = scalar_select %p161, %s162, %s163
    %p167 = pneg %p161
    %p168 = scmp.eq.s32.totalorder %s12, 1
    %p169 = por %p167, %p168
    %p170 = scmp.ne.s32.totalorder %s162, %s165
    %p171 = scmp.eq.s32.totalorder %s12, 0
    %p172 = por %p170, %p171
    %p173 = scmp.ne.s32.totalorder %s162, %s165
    %p174 = scmp.eq.s32.totalorder %s17, 1
    %p175 = por %p173, %p174
    %p176 = scmp.ne.s32.totalorder %s165, %s166
    %p177 = scmp.eq.s32.totalorder %s17, 0
    %p178 = por %p176, %p177
    %p179 = scmp.ne.s32.totalorder %s165, %s166
    %p180 = scmp.eq.s32.totalorder %s18, 1
    %p181 = por %p179, %p180
    %p183 = scmp.ne.s32.totalorder %s166, %s182
    %p184 = scmp.eq.s32.totalorder %s18, 0
    %p185 = por %p183, %p184
    %p186 = scmp.le.s32.totalorder 1, %s12
    %p187 = scmp.lt.s32.totalorder %s12, 3
    %p188 = pnand %p186, %p187
    %p189 = pneg %p188
    // Predicated region
    $region9: #{self_attention_forward.2} parent=5 // pred_check
      _
    $region10: #{self_attention_forward.2} parent=5 // pred_check_branch
      %191 = sbr.rel (%p188) target = $region12
    $region11: #{self_attention_forward.2} parent=5 // pred_region
      %s192 = ssub.s32 %s12, 1
      // Predicated region
      $region13: #{self_attention_forward.2} parent=11 // pred_check
        %p193 = pneg %p73
      $region14: #{self_attention_forward.2} parent=11 // pred_check_branch
        %195 = sbr.rel (%p193) target = $region16
      $region15: #{self_attention_forward.2} parent=11 // pred_region
        _
      $region16: #{self_attention_forward.2} parent=11 // pred_fallthru
        _
      // Predicated region
      $region17: #{self_attention_forward.2} parent=11 // pred_check
        %p196 = pneg %p94
      $region18: #{self_attention_forward.2} parent=11 // pred_check_branch
        %198 = sbr.rel (%p196) target = $region20
      $region19: #{self_attention_forward.2} parent=11 // pred_region
        _
      $region20: #{self_attention_forward.2} parent=11 // pred_fallthru
        _
    $region12: #{self_attention_forward.2} parent=5 // pred_fallthru
      _
    %p199 = scmp.lt.s32.totalorder %s12, 2
    // Predicated region
    $region21: #{self_attention_forward.2} parent=5 // pred_check
      %p200 = pneg %p199
    $region22: #{self_attention_forward.2} parent=5 // pred_check_branch
      %202 = sbr.rel (%p200) target = $region24
    $region23: #{self_attention_forward.2} parent=5 // pred_region
      // Predicated region
      $region25: #{self_attention_forward.2} parent=23 // pred_check
        %p203 = pneg %p46
      $region26: #{self_attention_forward.2} parent=23 // pred_check_branch
        %205 = sbr.rel (%p203) target = $region28
      $region27: #{self_attention_forward.2} parent=23 // pred_region
        %s206 = smul.u32 2, %s20
        %p207 = scmp.lt.s32.totalorder %s19, 1
        %s208 = scalar_select %p207, %s19, 1
        %p209 = scmp.lt.s32.totalorder %s206, 1
        %s210 = scalar_select %p209, %s206, 1
        %s211 = smul.addr %s208, 8
        %s212 = sadd.s32 %s210, %s211
        %s213 = smul.addr %s212, 8
        %s214 = scalar_lea.vmem %s0, %s213
        %s215 = smul.u32 2, %s20
      $region28: #{self_attention_forward.2} parent=23 // pred_fallthru
        _
    $region24: #{self_attention_forward.2} parent=5 // pred_fallthru
      _
    %p216 = scmp.le.s32.totalorder 1, %s12
    %p217 = scmp.lt.s32.totalorder %s12, 3
    %p218 = pnand %p216, %p217
    %p219 = pneg %p218
    // Predicated region
    $region29: #{self_attention_forward.2} parent=5 // pred_check
      _
    $region30: #{self_attention_forward.2} parent=5 // pred_check_branch
      %221 = sbr.rel (%p218) target = $region32
    $region31: #{self_attention_forward.2} parent=5 // pred_region
      %s222 = ssub.s32 %s12, 1
      %s223 = smul.u32 2, %s22
      %p224 = scmp.lt.s32.totalorder %s21, 1
      %s225 = scalar_select %p224, %s21, 1
      %p226 = scmp.lt.s32.totalorder %s223, 1
      %s227 = scalar_select %p226, %s223, 1
      %s228 = smul.addr %s225, 8
      %s229 = sadd.s32 %s227, %s228
      %s230 = smul.addr %s229, 8
      %s231 = scalar_lea.vmem %s0, %s230
      %p232 = pneg %p52
      %p233 = pneg %p49
      %p234 = pneg %p73
      %p235 = pneg %p70
      %p236 = pneg %p94
      %p237 = pneg %p91
      %p238 = pneg %p122
      %p239 = pneg %p119
      %s240 = smul.u32 2, %s22
      %p241 = scmp.lt.s32.totalorder %s21, 1
      %s242 = scalar_select %p241, %s21, 1
      %p243 = scmp.lt.s32.totalorder %s240, 1
      %s244 = scalar_select %p243, %s240, 1
      %s245 = smul.addr %s242, 8
      %s246 = sadd.s32 %s244, %s245
      %s247 = smul.addr %s246, 4
      %s248 = scalar_lea.vmem %s3, %s247
      %p249 = pneg %p150
      %p250 = pneg %p147
      %s251 = smul.u32 2, %s22
      %p252 = scmp.lt.s32.totalorder %s21, 1
      %s253 = scalar_select %p252, %s21, 1
      %p254 = scmp.lt.s32.totalorder %s251, 1
      %s255 = scalar_select %p254, %s251, 1
      %s256 = smul.addr %s253, 8
      %s257 = sadd.s32 %s255, %s256
      %s258 = smul.addr %s257, 4
      %s259 = scalar_lea.vmem %s4, %s258
      %p260 = pneg %p178
      %p261 = pneg %p175
      %s262 = smul.u32 32, %s22
      %p263 = scmp.lt.s32.totalorder %s21, 1
      %s264 = scalar_select %p263, %s21, 1
      %p265 = scmp.lt.s32.totalorder %s262, 31
      %s266 = scalar_select %p265, %s262, 31
      %s267 = smul.addr %s264, 32
      %s268 = sadd.s32 %s266, %s267
      %s269 = smul.addr %s268, 4
      %s270 = scalar_lea.vmem %s5, %s269
      %s271 = smul.u32 2, %s22
      %p272 = scmp.lt.s32.totalorder %s21, 1
      %s273 = scalar_select %p272, %s21, 1
      %p274 = scmp.lt.s32.totalorder %s271, 1
      %s275 = scalar_select %p274, %s271, 1
      %s276 = smul.addr %s273, 8
      %s277 = sadd.s32 %s275, %s276
      %s278 = smul.addr %s277, 8
      %s279 = scalar_lea.vmem %s0, %s278
      %s280 = smul.u32 2, %s22
      %s281 = smul.u32 2, %s22
      %p282 = scmp.lt.s32.totalorder %s21, 1
      %s283 = scalar_select %p282, %s21, 1
      %p284 = scmp.lt.s32.totalorder %s281, 1
      %s285 = scalar_select %p284, %s281, 1
      %s286 = smul.addr %s283, 8
      %s287 = sadd.s32 %s285, %s286
      %s288 = smul.addr %s287, 4
      %s289 = scalar_lea.vmem %s3, %s288
      %s290 = smul.u32 2, %s22
      %s291 = smul.u32 2, %s22
      %p292 = scmp.lt.s32.totalorder %s21, 1
      %s293 = scalar_select %p292, %s21, 1
      %p294 = scmp.lt.s32.totalorder %s291, 1
      %s295 = scalar_select %p294, %s291, 1
      %s296 = smul.addr %s293, 8
      %s297 = sadd.s32 %s295, %s296
      %s298 = smul.addr %s297, 4
      %s299 = scalar_lea.vmem %s4, %s298
      %s300 = smul.u32 2, %s22
      %s301 = smul.u32 32, %s22
      %p302 = scmp.lt.s32.totalorder %s21, 1
      %s303 = scalar_select %p302, %s21, 1
      %p304 = scmp.lt.s32.totalorder %s301, 31
      %s305 = scalar_select %p304, %s301, 31
      %s306 = smul.addr %s303, 32
      %s307 = sadd.s32 %s305, %s306
      %s308 = smul.addr %s307, 4
      %s309 = scalar_lea.vmem %s5, %s308
      %s310 = smul.u32 32, %s22
      %v312 = vld [vmem:[%s279] sm:$0xff]
      %v313 = vld [vmem:[%s279 + $0x8] sm:$0xff]
      %v314 = vld [vmem:[%s279 + $0x10] sm:$0xff]
      %v315 = vld [vmem:[%s279 + $0x18] sm:$0xff]
      %v316 = vld [vmem:[%s279 + $0x20] sm:$0xff]
      %v317 = vld [vmem:[%s279 + $0x28] sm:$0xff]
      %v318 = vld [vmem:[%s279 + $0x30] sm:$0xff]
      %v319 = vld [vmem:[%s279 + $0x38] sm:$0xff]
      %v320 = vld [vmem:[%s1] sm:$0xf]
      %v321 = vld [vmem:[%s1 + $0x4] sm:$0xf]
      %v322 = vld [vmem:[%s1 + $0x8] sm:$0xf]
      %v323 = vld [vmem:[%s1 + $0xc] sm:$0xf]
      %v324 = vld [vmem:[%s1 + $0x10] sm:$0xf]
      %v325 = vld [vmem:[%s1 + $0x14] sm:$0xf]
      %v326 = vld [vmem:[%s1 + $0x18] sm:$0xf]
      %v327 = vld [vmem:[%s1 + $0x1c] sm:$0xf]
      %v328 = vpack.c.bf16 %v314, %v312
      %v329 = vpack.c.bf16 %v315, %v313
      %v330 = vpack.c.bf16 %v318, %v316
      %v331 = vpack.c.bf16 %v319, %v317
      %v332 = vld [vmem:[%s2] sm:$0xff]
      %v333 = vld [vmem:[%s2 + $0x8] sm:$0xff]
      %v334 = vld [vmem:[%s2 + $0x10] sm:$0xff]
      %v335 = vld [vmem:[%s2 + $0x18] sm:$0xff]
      %v336 = vld [vmem:[%s2 + $0x20] sm:$0xff]
      %v337 = vld [vmem:[%s2 + $0x28] sm:$0xff]
      %v338 = vld [vmem:[%s2 + $0x30] sm:$0xff]
      %v339 = vld [vmem:[%s2 + $0x38] sm:$0xff]
      %341 = vset.pattern.permute.xlu0 0
      %342 = vperm.xlu0 %341, %v332
      %v343 = vpop.permute.xlu0 %342
      %346 = vset.pattern.permute.xlu0 0
      %347 = vperm.xlu0 %346, %v333
      %v348 = vpop.permute.xlu0 %347
      %351 = vset.pattern.permute.xlu0 0
      %352 = vperm.xlu0 %351, %v334
      %v353 = vpop.permute.xlu0 %352
      %356 = vset.pattern.permute.xlu0 0
      %357 = vperm.xlu0 %356, %v335
      %v358 = vpop.permute.xlu0 %357
      %361 = vset.pattern.permute.xlu0 0
      %362 = vperm.xlu0 %361, %v336
      %v363 = vpop.permute.xlu0 %362
      %366 = vset.pattern.permute.xlu0 0
      %367 = vperm.xlu0 %366, %v337
      %v368 = vpop.permute.xlu0 %367
      %371 = vset.pattern.permute.xlu0 0
      %372 = vperm.xlu0 %371, %v338
      %v373 = vpop.permute.xlu0 %372
      %376 = vset.pattern.permute.xlu0 0
      %377 = vperm.xlu0 %376, %v339
      %v378 = vpop.permute.xlu0 %377
      %v388 = vunpack.c.l.b16 %v320
      %v389 = vunpack.c.l.b16 %v321
      %v390 = vunpack.c.l.b16 %v322
      %v391 = vunpack.c.l.b16 %v323
      %v392 = vunpack.c.l.b16 %v324
      %v393 = vunpack.c.l.b16 %v325
      %v394 = vunpack.c.l.b16 %v326
      %v395 = vunpack.c.l.b16 %v327
      %v396 = vpack.c.b16 %v389, %v388
      %v397 = vpack.c.b16 %v391, %v390
      %v398 = vpack.c.b16 %v393, %v392
      %v399 = vpack.c.b16 %v395, %v394
      %vm400 = vcmask 261120
      %v402 = vsel %vm400, %v396, 0
      %v405 = vsel %vm400, %v397, 0
      %v408 = vsel %vm400, %v398, 0
      %v411 = vsel %vm400, %v399, 0
      %413 = vmatprep.subr.bf16.mxu0 %v329
      %414 = vmatpush1.bf16.msra.mxu0 %v328
      %415 = vmatprep.subr.bf16.mxu0 %v331
      %416 = vmatpush1.bf16.msra.mxu0 %v330
      %417 = vmatprep.subr.bf16.mxu0 0
      %418 = vmatpush1.bf16.msra.mxu0 0
      %419 = vmatprep.subr.bf16.mxu0 0
      %420 = vmatpush1.bf16.msra.mxu0 0
      %421 = vmatprep.subr.bf16.mxu0 0
      %422 = vmatpush1.bf16.msra.mxu0 0
      %423 = vmatprep.subr.bf16.mxu0 0
      %424 = vmatpush1.bf16.msra.mxu0 0
      %425 = vmatprep.subr.bf16.mxu0 0
      %426 = vmatpush1.bf16.msra.mxu0 0
      %427 = vmatprep.subr.bf16.mxu0 0
      %428 = vmatpush1.bf16.msra.mxu0 0
      %429 = vmatprep.subr.bf16.mxu0 0
      %430 = vmatpush1.bf16.msra.mxu0 0
      %431 = vmatprep.subr.bf16.mxu0 0
      %432 = vmatpush1.bf16.msra.mxu0 0
      %433 = vmatprep.subr.bf16.mxu0 0
      %434 = vmatpush1.bf16.msra.mxu0 0
      %435 = vmatprep.subr.bf16.mxu0 0
      %436 = vmatpush1.bf16.msra.mxu0 0
      %437 = vmatprep.subr.bf16.mxu0 0
      %438 = vmatpush1.bf16.msra.mxu0 0
      %439 = vmatprep.subr.bf16.mxu0 0
      %440 = vmatpush1.bf16.msra.mxu0 0
      %441 = vmatprep.subr.bf16.mxu0 0
      %442 = vmatpush1.bf16.msra.mxu0 0
      %443 = vmatprep.subr.bf16.mxu0 0
      %444 = vmatpush1.bf16.msra.mxu0 0
      %445 = vmatprep.mubr.bf16.mxu0 0
      %446 = vmatmul.mubr.bf16.gmra.mrb[0].mxu0 %v402
      %v447 = vpop.f32.mrb[0].mxu0
      %v448 = vadd.f32 %v343, %v447
      %v449 = vpop.f32.mrb[0].mxu0
      %v450 = vadd.f32 %v343, %v449
      %v451 = vpop.f32.mrb[0].mxu0
      %v452 = vadd.f32 %v348, %v451
      %v453 = vpop.f32.mrb[0].mxu0
      %v454 = vadd.f32 %v348, %v453
      %455 = vmatprep.mubr.bf16.mxu0 0
      %456 = vmatmul.mubr.bf16.gmra.mrb[0].mxu0 %v405
      %v457 = vpop.f32.mrb[0].mxu0
      %v458 = vadd.f32 %v353, %v457
      %v459 = vpop.f32.mrb[0].mxu0
      %v460 = vadd.f32 %v353, %v459
      %v461 = vpop.f32.mrb[0].mxu0
      %v462 = vadd.f32 %v358, %v461
      %v463 = vpop.f32.mrb[0].mxu0
      %v464 = vadd.f32 %v358, %v463
      %465 = vmatprep.mubr.bf16.mxu0 0
      %466 = vmatmul.mubr.bf16.gmra.mrb[0].mxu0 %v408
      %v467 = vpop.f32.mrb[0].mxu0
      %v468 = vadd.f32 %v363, %v467
      %v469 = vpop.f32.mrb[0].mxu0
      %v470 = vadd.f32 %v363, %v469
      %v471 = vpop.f32.mrb[0].mxu0
      %v472 = vadd.f32 %v368, %v471
      %v473 = vpop.f32.mrb[0].mxu0
      %v474 = vadd.f32 %v368, %v473
      %475 = vmatprep.mubr.bf16.mxu0 0
      %476 = vmatmul.mubr.bf16.gmra.mrb[0].mxu0 %v411
      %v477 = vpop.f32.mrb[0].mxu0
      %v478 = vadd.f32 %v373, %v477
      %v479 = vpop.f32.mrb[0].mxu0
      %v480 = vadd.f32 %v373, %v479
      %v481 = vpop.f32.mrb[0].mxu0
      %v482 = vadd.f32 %v378, %v481
      %v483 = vpop.f32.mrb[0].mxu0
      %v484 = vadd.f32 %v378, %v483
      %485 = vdwg.mxu0
      %v486 = vpack.c.bf16 %v452, %v448
      %v487 = vpack.c.bf16 %v454, %v450
      %v488 = vpack.c.bf16 %v462, %v458
      %v489 = vpack.c.bf16 %v464, %v460
      %v494 = vunpack.c.l.b16 %v486
      %v495 = vunpack.c.l.b16 %v487
      %v496 = vunpack.c.h.b16 %v486
      %v497 = vunpack.c.h.b16 %v487
      %v498 = vunpack.c.l.b16 %v488
      %v499 = vunpack.c.l.b16 %v489
      %v500 = vunpack.c.h.b16 %v488
      %v501 = vunpack.c.h.b16 %v489
      %v502 = vpack.c.b16 %v495, %v494
      %v503 = vpack.c.b16 %v497, %v496
      %v504 = vpack.c.b16 %v499, %v498
      %v505 = vpack.c.b16 %v501, %v500
      %510 = vst [vmem:[%s289] sm:$0xff] %v502
      %511 = vst [vmem:[%s289 + $0x8] sm:$0xff] %v503
      %512 = vst [vmem:[%s289 + $0x10] sm:$0xff] %v504
      %513 = vst [vmem:[%s289 + $0x18] sm:$0xff] %v505
      %v514 = vpack.c.bf16 %v472, %v468
      %v515 = vpack.c.bf16 %v474, %v470
      %v516 = vpack.c.bf16 %v482, %v478
      %v517 = vpack.c.bf16 %v484, %v480
      %v522 = vunpack.c.l.b16 %v514
      %v523 = vunpack.c.l.b16 %v515
      %v524 = vunpack.c.h.b16 %v514
      %v525 = vunpack.c.h.b16 %v515
      %v526 = vunpack.c.l.b16 %v516
      %v527 = vunpack.c.l.b16 %v517
      %v528 = vunpack.c.h.b16 %v516
      %v529 = vunpack.c.h.b16 %v517
      %v530 = vpack.c.b16 %v523, %v522
      %v531 = vpack.c.b16 %v525, %v524
      %v532 = vpack.c.b16 %v527, %v526
      %v533 = vpack.c.b16 %v529, %v528
      %538 = vst [vmem:[%s299] sm:$0xff] %v530
      %539 = vst [vmem:[%s299 + $0x8] sm:$0xff] %v531
      %540 = vst [vmem:[%s299 + $0x10] sm:$0xff] %v532
      %541 = vst [vmem:[%s299 + $0x18] sm:$0xff] %v533
      %542 = vxpose.xlu0.b32.start [1/16] %v312, 128
      %543 = vxpose.xlu0.b32.cont [2/16] %v314, 128
      %544 = vxpose.xlu0.b32.cont [3/16] %v316, 128
      %545 = vxpose.xlu0.b32.cont [4/16] %v318, 128
      %546 = vxpose.xlu0.b32.cont [5/16] 0.0, 128
      %547 = vxpose.xlu0.b32.cont [6/16] 0.0, 128
      %548 = vxpose.xlu0.b32.cont [7/16] 0.0, 128
      %549 = vxpose.xlu0.b32.cont [8/16] 0.0, 128
      %550 = vxpose.xlu0.b32.cont [9/16] 0.0, 128
      %551 = vxpose.xlu0.b32.cont [10/16] 0.0, 128
      %552 = vxpose.xlu0.b32.cont [11/16] 0.0, 128
      %553 = vxpose.xlu0.b32.cont [12/16] 0.0, 128
      %554 = vxpose.xlu0.b32.cont [13/16] 0.0, 128
      %555 = vxpose.xlu0.b32.cont [14/16] 0.0, 128
      %556 = vxpose.xlu0.b32.cont [15/16] 0.0, 128
      %557 = vxpose.xlu0.b32.end [16/16] 0.0, 128
      %v558 = vpop.trf.xlu0
      %v559 = vpop.trf.xlu0
      %v560 = vpop.trf.xlu0
      %v561 = vpop.trf.xlu0
      %v562 = vpop.trf.xlu0
      %v563 = vpop.trf.xlu0
      %v564 = vpop.trf.xlu0
      %v565 = vpop.trf.xlu0
      %v566 = vpop.trf.xlu0
      %v567 = vpop.trf.xlu0
      %v568 = vpop.trf.xlu0
      %v569 = vpop.trf.xlu0
      %v570 = vpop.trf.xlu0
      %v571 = vpop.trf.xlu0
      %v572 = vpop.trf.xlu0
      %v573 = vpop.trf.xlu0
      %574 = vxpose.xlu0.b32.start [1/16] %v313, 128
      %575 = vxpose.xlu0.b32.cont [2/16] %v315, 128
      %576 = vxpose.xlu0.b32.cont [3/16] %v317, 128
      %577 = vxpose.xlu0.b32.cont [4/16] %v319, 128
      %578 = vxpose.xlu0.b32.cont [5/16] 0.0, 128
      %579 = vxpose.xlu0.b32.cont [6/16] 0.0, 128
      %580 = vxpose.xlu0.b32.cont [7/16] 0.0, 128
      %581 = vxpose.xlu0.b32.cont [8/16] 0.0, 128
      %582 = vxpose.xlu0.b32.cont [9/16] 0.0, 128
      %583 = vxpose.xlu0.b32.cont [10/16] 0.0, 128
      %584 = vxpose.xlu0.b32.cont [11/16] 0.0, 128
      %585 = vxpose.xlu0.b32.cont [12/16] 0.0, 128
      %586 = vxpose.xlu0.b32.cont [13/16] 0.0, 128
      %587 = vxpose.xlu0.b32.cont [14/16] 0.0, 128
      %588 = vxpose.xlu0.b32.cont [15/16] 0.0, 128
      %589 = vxpose.xlu0.b32.end [16/16] 0.0, 128
      %v590 = vpop.trf.xlu0
      %v591 = vpop.trf.xlu0
      %v592 = vpop.trf.xlu0
      %v593 = vpop.trf.xlu0
      %v594 = vpop.trf.xlu0
      %v595 = vpop.trf.xlu0
      %v596 = vpop.trf.xlu0
      %v597 = vpop.trf.xlu0
      %v598 = vpop.trf.xlu0
      %v599 = vpop.trf.xlu0
      %v600 = vpop.trf.xlu0
      %v601 = vpop.trf.xlu0
      %v602 = vpop.trf.xlu0
      %v603 = vpop.trf.xlu0
      %v604 = vpop.trf.xlu0
      %v605 = vpop.trf.xlu0
      %v606 = vpack.c.bf16 %v559, %v558
      %v607 = vpack.c.bf16 %v561, %v560
      %v608 = vpack.c.bf16 %v563, %v562
      %v609 = vpack.c.bf16 %v565, %v564
      %v610 = vpack.c.bf16 %v567, %v566
      %v611 = vpack.c.bf16 %v569, %v568
      %v612 = vpack.c.bf16 %v571, %v570
      %v613 = vpack.c.bf16 %v573, %v572
      %v614 = vpack.c.bf16 %v591, %v590
      %v615 = vpack.c.bf16 %v593, %v592
      %v616 = vpack.c.bf16 %v595, %v594
      %v617 = vpack.c.bf16 %v597, %v596
      %v618 = vpack.c.bf16 %v599, %v598
      %v619 = vpack.c.bf16 %v601, %v600
      %v620 = vpack.c.bf16 %v603, %v602
      %v621 = vpack.c.bf16 %v605, %v604
      %v638 = vunpack.c.l.b16 %v606
      %v639 = vunpack.c.h.b16 %v606
      %v640 = vunpack.c.l.b16 %v607
      %v641 = vunpack.c.h.b16 %v607
      %v642 = vunpack.c.l.b16 %v608
      %v643 = vunpack.c.h.b16 %v608
      %v644 = vunpack.c.l.b16 %v609
      %v645 = vunpack.c.h.b16 %v609
      %v646 = vunpack.c.l.b16 %v610
      %v647 = vunpack.c.h.b16 %v610
      %v648 = vunpack.c.l.b16 %v611
      %v649 = vunpack.c.h.b16 %v611
      %v650 = vunpack.c.l.b16 %v612
      %v651 = vunpack.c.h.b16 %v612
      %v652 = vunpack.c.l.b16 %v613
      %v653 = vunpack.c.h.b16 %v613
      %v654 = vunpack.c.l.b16 %v614
      %v655 = vunpack.c.h.b16 %v614
      %v656 = vunpack.c.l.b16 %v615
      %v657 = vunpack.c.h.b16 %v615
      %v658 = vunpack.c.l.b16 %v616
      %v659 = vunpack.c.h.b16 %v616
      %v660 = vunpack.c.l.b16 %v617
      %v661 = vunpack.c.h.b16 %v617
      %v662 = vunpack.c.l.b16 %v618
      %v663 = vunpack.c.h.b16 %v618
      %v664 = vunpack.c.l.b16 %v619
      %v665 = vunpack.c.h.b16 %v619
      %v666 = vunpack.c.l.b16 %v620
      %v667 = vunpack.c.h.b16 %v620
      %v668 = vunpack.c.l.b16 %v621
      %v669 = vunpack.c.h.b16 %v621
      %v670 = vpack.c.b16 %v638, %v638
      %v671 = vpack.c.b16 %v639, %v639
      %v672 = vpack.c.b16 %v640, %v640
      %v673 = vpack.c.b16 %v641, %v641
      %v674 = vpack.c.b16 %v642, %v642
      %v675 = vpack.c.b16 %v643, %v643
      %v676 = vpack.c.b16 %v644, %v644
      %v677 = vpack.c.b16 %v645, %v645
      %v678 = vpack.c.b16 %v646, %v646
      %v679 = vpack.c.b16 %v647, %v647
      %v680 = vpack.c.b16 %v648, %v648
      %v681 = vpack.c.b16 %v649, %v649
      %v682 = vpack.c.b16 %v650, %v650
      %v683 = vpack.c.b16 %v651, %v651
      %v684 = vpack.c.b16 %v652, %v652
      %v685 = vpack.c.b16 %v653, %v653
      %v686 = vpack.c.b16 %v654, %v654
      %v687 = vpack.c.b16 %v655, %v655
      %v688 = vpack.c.b16 %v656, %v656
      %v689 = vpack.c.b16 %v657, %v657
      %v690 = vpack.c.b16 %v658, %v658
      %v691 = vpack.c.b16 %v659, %v659
      %v692 = vpack.c.b16 %v660, %v660
      %v693 = vpack.c.b16 %v661, %v661
      %v694 = vpack.c.b16 %v662, %v662
      %v695 = vpack.c.b16 %v663, %v663
      %v696 = vpack.c.b16 %v664, %v664
      %v697 = vpack.c.b16 %v665, %v665
      %v698 = vpack.c.b16 %v666, %v666
      %v699 = vpack.c.b16 %v667, %v667
      %v700 = vpack.c.b16 %v668, %v668
      %v701 = vpack.c.b16 %v669, %v669
      %vm734 = vcmask 257024
      %735 = vst.msk [vmem:[%s309] sm:$0xf] %vm734, %v670
      %736 = vst.msk [vmem:[%s309 + $0x4] sm:$0xf] %vm734, %v671
      %737 = vst.msk [vmem:[%s309 + $0x8] sm:$0xf] %vm734, %v672
      %738 = vst.msk [vmem:[%s309 + $0xc] sm:$0xf] %vm734, %v673
      %739 = vst.msk [vmem:[%s309 + $0x10] sm:$0xf] %vm734, %v674
      %740 = vst.msk [vmem:[%s309 + $0x14] sm:$0xf] %vm734, %v675
      %741 = vst.msk [vmem:[%s309 + $0x18] sm:$0xf] %vm734, %v676
      %742 = vst.msk [vmem:[%s309 + $0x1c] sm:$0xf] %vm734, %v677
      %743 = vst.msk [vmem:[%s309 + $0x20] sm:$0xf] %vm734, %v678
      %744 = vst.msk [vmem:[%s309 + $0x24] sm:$0xf] %vm734, %v679
      %745 = vst.msk [vmem:[%s309 + $0x28] sm:$0xf] %vm734, %v680
      %746 = vst.msk [vmem:[%s309 + $0x2c] sm:$0xf] %vm734, %v681
      %747 = vst.msk [vmem:[%s309 + $0x30] sm:$0xf] %vm734, %v682
      %748 = vst.msk [vmem:[%s309 + $0x34] sm:$0xf] %vm734, %v683
      %749 = vst.msk [vmem:[%s309 + $0x38] sm:$0xf] %vm734, %v684
      %750 = vst.msk [vmem:[%s309 + $0x3c] sm:$0xf] %vm734, %v685
      %751 = vst.msk [vmem:[%s309 + $0x40] sm:$0xf] %vm734, %v686
      %752 = vst.msk [vmem:[%s309 + $0x44] sm:$0xf] %vm734, %v687
      %753 = vst.msk [vmem:[%s309 + $0x48] sm:$0xf] %vm734, %v688
      %754 = vst.msk [vmem:[%s309 + $0x4c] sm:$0xf] %vm734, %v689
      %755 = vst.msk [vmem:[%s309 + $0x50] sm:$0xf] %vm734, %v690
      %756 = vst.msk [vmem:[%s309 + $0x54] sm:$0xf] %vm734, %v691
      %757 = vst.msk [vmem:[%s309 + $0x58] sm:$0xf] %vm734, %v692
      %758 = vst.msk [vmem:[%s309 + $0x5c] sm:$0xf] %vm734, %v693
      %759 = vst.msk [vmem:[%s309 + $0x60] sm:$0xf] %vm734, %v694
      %760 = vst.msk [vmem:[%s309 + $0x64] sm:$0xf] %vm734, %v695
      %761 = vst.msk [vmem:[%s309 + $0x68] sm:$0xf] %vm734, %v696
      %762 = vst.msk [vmem:[%s309 + $0x6c] sm:$0xf] %vm734, %v697
      %763 = vst.msk [vmem:[%s309 + $0x70] sm:$0xf] %vm734, %v698
      %764 = vst.msk [vmem:[%s309 + $0x74] sm:$0xf] %vm734, %v699
      %765 = vst.msk [vmem:[%s309 + $0x78] sm:$0xf] %vm734, %v700
      %766 = vst.msk [vmem:[%s309 + $0x7c] sm:$0xf] %vm734, %v701
      %s767 = smul.u32 2, %s22
      %p768 = scmp.lt.s32.totalorder %s21, 1
      %s769 = scalar_select %p768, %s21, 1
      %p770 = scmp.lt.s32.totalorder %s767, 1
      %s771 = scalar_select %p770, %s767, 1
      %s772 = smul.addr %s769, 8
      %s773 = sadd.s32 %s771, %s772
      %s774 = smul.addr %s773, 4
      %s775 = scalar_lea.vmem %s3, %s774
      %s776 = smul.u32 2, %s22
      %p777 = scmp.lt.s32.totalorder %s21, 1
      %s778 = scalar_select %p777, %s21, 1
      %p779 = scmp.lt.s32.totalorder %s776, 1
      %s780 = scalar_select %p779, %s776, 1
      %s781 = smul.addr %s778, 8
      %s782 = sadd.s32 %s780, %s781
      %s783 = smul.addr %s782, 4
      %s784 = scalar_lea.vmem %s4, %s783
      %s785 = smul.u32 32, %s22
      %p786 = scmp.lt.s32.totalorder %s21, 1
      %s787 = scalar_select %p786, %s21, 1
      %p788 = scmp.lt.s32.totalorder %s785, 31
      %s789 = scalar_select %p788, %s785, 31
      %s790 = smul.addr %s787, 32
      %s791 = sadd.s32 %s789, %s790
      %s792 = smul.addr %s791, 4
      %s793 = scalar_lea.vmem %s5, %s792
      // Predicated region
      $region33: #{self_attention_forward.2} parent=31 // pred_check
        %p794 = pneg %p119
      $region34: #{self_attention_forward.2} parent=31 // pred_check_branch
        %796 = sbr.rel (%p794) target = $region36
      $region35: #{self_attention_forward.2} parent=31 // pred_region
        %s797 = smul.u32 2, %s22
      $region36: #{self_attention_forward.2} parent=31 // pred_fallthru
        _
      // Predicated region
      $region37: #{self_attention_forward.2} parent=31 // pred_check
        %p798 = pneg %p147
      $region38: #{self_attention_forward.2} parent=31 // pred_check_branch
        %800 = sbr.rel (%p798) target = $region40
      $region39: #{self_attention_forward.2} parent=31 // pred_region
        %s801 = smul.u32 2, %s22
      $region40: #{self_attention_forward.2} parent=31 // pred_fallthru
        _
      // Predicated region
      $region41: #{self_attention_forward.2} parent=31 // pred_check
        %p802 = pneg %p175
      $region42: #{self_attention_forward.2} parent=31 // pred_check_branch
        %804 = sbr.rel (%p802) target = $region44
      $region43: #{self_attention_forward.2} parent=31 // pred_region
        %s805 = smul.u32 32, %s22
      $region44: #{self_attention_forward.2} parent=31 // pred_fallthru
        _
    $region32: #{self_attention_forward.2} parent=5 // pred_fallthru
      _
    %p806 = scmp.le.s32.totalorder 2, %s12
    // Predicated region
    $region45: #{self_attention_forward.2} parent=5 // pred_check
      %p807 = pneg %p806
    $region46: #{self_attention_forward.2} parent=5 // pred_check_branch
      %809 = sbr.rel (%p807) target = $region48
    $region47: #{self_attention_forward.2} parent=5 // pred_region
      %s810 = ssub.s32 %s12, 2
      // Predicated region
      $region49: #{self_attention_forward.2} parent=47 // pred_check
        %p811 = pneg %p125
      $region50: #{self_attention_forward.2} parent=47 // pred_check_branch
        %813 = sbr.rel (%p811) target = $region52
      $region51: #{self_attention_forward.2} parent=47 // pred_region
        %s814 = smul.u32 2, %s24
        %p815 = scmp.lt.s32.totalorder %s23, 1
        %s816 = scalar_select %p815, %s23, 1
        %p817 = scmp.lt.s32.totalorder %s814, 1
        %s818 = scalar_select %p817, %s814, 1
        %s819 = smul.addr %s816, 8
        %s820 = sadd.s32 %s818, %s819
        %s821 = smul.addr %s820, 4
        %s822 = scalar_lea.vmem %s3, %s821
      $region52: #{self_attention_forward.2} parent=47 // pred_fallthru
        _
      // Predicated region
      $region53: #{self_attention_forward.2} parent=47 // pred_check
        %p823 = pneg %p153
      $region54: #{self_attention_forward.2} parent=47 // pred_check_branch
        %825 = sbr.rel (%p823) target = $region56
      $region55: #{self_attention_forward.2} parent=47 // pred_region
        %s826 = smul.u32 2, %s24
        %p827 = scmp.lt.s32.totalorder %s23, 1
        %s828 = scalar_select %p827, %s23, 1
        %p829 = scmp.lt.s32.totalorder %s826, 1
        %s830 = scalar_select %p829, %s826, 1
        %s831 = smul.addr %s828, 8
        %s832 = sadd.s32 %s830, %s831
        %s833 = smul.addr %s832, 4
        %s834 = scalar_lea.vmem %s4, %s833
      $region56: #{self_attention_forward.2} parent=47 // pred_fallthru
        _
      // Predicated region
      $region57: #{self_attention_forward.2} parent=47 // pred_check
        %p835 = pneg %p181
      $region58: #{self_attention_forward.2} parent=47 // pred_check_branch
        %837 = sbr.rel (%p835) target = $region60
      $region59: #{self_attention_forward.2} parent=47 // pred_region
        %s838 = smul.u32 32, %s24
        %p839 = scmp.lt.s32.totalorder %s23, 1
        %s840 = scalar_select %p839, %s23, 1
        %p841 = scmp.lt.s32.totalorder %s838, 31
        %s842 = scalar_select %p841, %s838, 31
        %s843 = smul.addr %s840, 32
        %s844 = sadd.s32 %s842, %s843
        %s845 = smul.addr %s844, 4
        %s846 = scalar_lea.vmem %s5, %s845
      $region60: #{self_attention_forward.2} parent=47 // pred_fallthru
        _
    $region48: #{self_attention_forward.2} parent=5 // pred_fallthru
      _
  $region6: #{self_attention_forward.2} parent=0 // loop_footer
    %s16 = sadd.s32 1, %s12
  $region7: #{self_attention_forward.2} parent=0 // loop_footer_branch
    %11 = sbr.rel target = $region3
  $region8: #{self_attention_forward.2} parent=0 // loop_exit
    _

// kernel: self_attention_forward.3
$region0: #{self_attention_forward.3}
  #allocation0 [shape = 'u32[]', space=smem, size = 0x4, offset = 0x4, fixed_abs, tag = 'smem constant byte address 0x4 - core index']
  #allocation1 [shape = 'u32[144,128]{1,0:T(1,128)}', space=vmem, size = 0x12000, scoped, tag = 'internal scratch']
  #allocation2 [shape = 'f32[1]{0:T(128)S(6)}', space=smem, size = 0x200, scoped, tag = 'scoped memory for self_attention_forward.3']
  %s0 = inlined_call_operand.vmem [shape: bf16[2,32,256], index: 0, kind: input, shape index: {}]
  %s1 = inlined_call_operand.vmem [shape: bf16[2,256,32], index: 1, kind: input, shape index: {}]
  %s2 = inlined_call_operand.vmem [shape: bf16[2,32,256], index: 2, kind: input, shape index: {}]
  %s3 = inlined_call_operand.vmem [shape: f32[2,32,256], index: 3, kind: input, shape index: {}]
  %s4 = inlined_call_operand.<no memory space> [shape: f32[1], index: 4, kind: input, shape index: {}]
  %s5 = inlined_call_operand.vmem [shape: f32[2,32,256], index: 5, kind: output, shape index: {}]
  %s6 = sld [smem:[#allocation0]]
  $region53: #{self_attention_forward.3} parent=0
    _
  %s8 = ssub.s32 1, %s6
  %s9 = scalar_select 0, %s8, %s6
  %10 = sst [smem:[#allocation2]] %s4
  loop: start=0, step=1, limit=4
  $region2: #{self_attention_forward.3} parent=0 // loop_pre_header
    _
  $region3: #{self_attention_forward.3} parent=0 // loop_header
    %s12 = sphi 0, %s16
    %p13 = scmp.ge.s32.totalorder %s12, 4
    %s19 = sphi 0, %s31
    %s20 = sphi 0, %s27
    %s21 = sphi 0, %s19
    %s22 = sphi 0, %s20
    %s23 = sphi 0, %s21
    %s24 = sphi 0, %s22
    %s36 = sphi 0, %s38
    %s39 = sphi 0, %s36
    %s40 = sphi 0, %s39
    %s56 = sphi 0, %s40
    %s62 = sphi 0, %s64
    %s65 = sphi 0, %s62
    %s66 = sphi 0, %s65
    %s82 = sphi 0, %s66
    %s88 = sphi 0, %s90
    %s91 = sphi 0, %s88
    %s92 = sphi 0, %s91
    %s108 = sphi 0, %s92
    %s116 = sphi 0, %s118
    %s119 = sphi 0, %s116
    %s120 = sphi 0, %s119
    %s136 = sphi 0, %s120
    %s140 = sphi 0, %s140
    %s142 = sphi 0, %s140
    %s143 = sphi 0, %s142
    %s157 = sphi 0, %s143
    %s165 = sphi 0, %s167
    %s168 = sphi 0, %s165
    %s169 = sphi 0, %s168
    %s185 = sphi 0, %s169
  $region4: #{self_attention_forward.3} parent=0 // loop_header_branch
    %15 = sbr.rel (%p13) target = $region8
  $region5: #{self_attention_forward.3} parent=0 // loop_body
    %s17 = ssub.s32 %s12, 1
    %s18 = ssub.s32 %s12, 2
    %s25 = sadd.s32 1, %s20
    %p26 = scmp.ge.s32.totalorder %s25, 1
    %s27 = scalar_select %p26, 0, %s25
    %s28 = sadd.s32 1, %s19
    %s29 = scalar_select %p26, %s28, %s19
    %p30 = scmp.ge.s32.totalorder %s29, 2
    %s31 = scalar_select %p30, 0, %s29
    %s32 = ssub.s32 %s19, %s31
    %s33 = ssub.s32 %s20, %s27
    %s34 = sor.u32 %s32, %s33
    %p35 = scmp.eq.s32.totalorder %s34, 0
    %s37 = sadd.s32 %s36, 1
    %s38 = scalar_select %p35, %s36, %s37
    %p41 = pneg %p35
    %p42 = scmp.eq.s32.totalorder %s12, 1
    %p43 = por %p41, %p42
    %p44 = scmp.ne.s32.totalorder %s36, %s39
    %p45 = scmp.eq.s32.totalorder %s12, 0
    %p46 = por %p44, %p45
    %p47 = scmp.ne.s32.totalorder %s36, %s39
    %p48 = scmp.eq.s32.totalorder %s17, 1
    %p49 = por %p47, %p48
    %p50 = scmp.ne.s32.totalorder %s39, %s40
    %p51 = scmp.eq.s32.totalorder %s17, 0
    %p52 = por %p50, %p51
    %p53 = scmp.ne.s32.totalorder %s39, %s40
    %p54 = scmp.eq.s32.totalorder %s18, 1
    %p55 = por %p53, %p54
    %p57 = scmp.ne.s32.totalorder %s40, %s56
    %p58 = scmp.eq.s32.totalorder %s18, 0
    %p59 = por %p57, %p58
    %s60 = ssub.s32 %s19, %s31
    %p61 = scmp.eq.s32.totalorder %s60, 0
    %s63 = sadd.s32 %s62, 1
    %s64 = scalar_select %p61, %s62, %s63
    %p67 = pneg %p61
    %p68 = scmp.eq.s32.totalorder %s12, 1
    %p69 = por %p67, %p68
    %p70 = scmp.ne.s32.totalorder %s62, %s65
    %p71 = scmp.eq.s32.totalorder %s12, 0
    %p72 = por %p70, %p71
    %p73 = scmp.ne.s32.totalorder %s62, %s65
    %p74 = scmp.eq.s32.totalorder %s17, 1
    %p75 = por %p73, %p74
    %p76 = scmp.ne.s32.totalorder %s65, %s66
    %p77 = scmp.eq.s32.totalorder %s17, 0
    %p78 = por %p76, %p77
    %p79 = scmp.ne.s32.totalorder %s65, %s66
    %p80 = scmp.eq.s32.totalorder %s18, 1
    %p81 = por %p79, %p80
    %p83 = scmp.ne.s32.totalorder %s66, %s82
    %p84 = scmp.eq.s32.totalorder %s18, 0
    %p85 = por %p83, %p84
    %s86 = ssub.s32 %s19, %s31
    %p87 = scmp.eq.s32.totalorder %s86, 0
    %s89 = sadd.s32 %s88, 1
    %s90 = scalar_select %p87, %s88, %s89
    %p93 = pneg %p87
    %p94 = scmp.eq.s32.totalorder %s12, 1
    %p95 = por %p93, %p94
    %p96 = scmp.ne.s32.totalorder %s88, %s91
    %p97 = scmp.eq.s32.totalorder %s12, 0
    %p98 = por %p96, %p97
    %p99 = scmp.ne.s32.totalorder %s88, %s91
    %p100 = scmp.eq.s32.totalorder %s17, 1
    %p101 = por %p99, %p100
    %p102 = scmp.ne.s32.totalorder %s91, %s92
    %p103 = scmp.eq.s32.totalorder %s17, 0
    %p104 = por %p102, %p103
    %p105 = scmp.ne.s32.totalorder %s91, %s92
    %p106 = scmp.eq.s32.totalorder %s18, 1
    %p107 = por %p105, %p106
    %p109 = scmp.ne.s32.totalorder %s92, %s108
    %p110 = scmp.eq.s32.totalorder %s18, 0
    %p111 = por %p109, %p110
    %s112 = ssub.s32 %s19, %s31
    %s113 = ssub.s32 %s20, %s27
    %s114 = sor.u32 %s112, %s113
    %p115 = scmp.eq.s32.totalorder %s114, 0
    %s117 = sadd.s32 %s116, 1
    %s118 = scalar_select %p115, %s116, %s117
    %p121 = pneg %p115
    %p122 = scmp.eq.s32.totalorder %s12, 1
    %p123 = por %p121, %p122
    %p124 = scmp.ne.s32.totalorder %s116, %s119
    %p125 = scmp.eq.s32.totalorder %s12, 0
    %p126 = por %p124, %p125
    %p127 = scmp.ne.s32.totalorder %s116, %s119
    %p128 = scmp.eq.s32.totalorder %s17, 1
    %p129 = por %p127, %p128
    %p130 = scmp.ne.s32.totalorder %s119, %s120
    %p131 = scmp.eq.s32.totalorder %s17, 0
    %p132 = por %p130, %p131
    %p133 = scmp.ne.s32.totalorder %s119, %s120
    %p134 = scmp.eq.s32.totalorder %s18, 1
    %p135 = por %p133, %p134
    %p137 = scmp.ne.s32.totalorder %s120, %s136
    %p138 = scmp.eq.s32.totalorder %s18, 0
    %p139 = por %p137, %p138
    %s141 = sadd.s32 %s140, 1
    %p144 = scmp.eq.s32.totalorder %s12, 1
    %p145 = scmp.ne.s32.totalorder %s140, %s142
    %p146 = scmp.eq.s32.totalorder %s12, 0
    %p147 = por %p145, %p146
    %p148 = scmp.ne.s32.totalorder %s140, %s142
    %p149 = scmp.eq.s32.totalorder %s17, 1
    %p150 = por %p148, %p149
    %p151 = scmp.ne.s32.totalorder %s142, %s143
    %p152 = scmp.eq.s32.totalorder %s17, 0
    %p153 = por %p151, %p152
    %p154 = scmp.ne.s32.totalorder %s142, %s143
    %p155 = scmp.eq.s32.totalorder %s18, 1
    %p156 = por %p154, %p155
    %p158 = scmp.ne.s32.totalorder %s143, %s157
    %p159 = scmp.eq.s32.totalorder %s18, 0
    %p160 = por %p158, %p159
    %s161 = ssub.s32 %s19, %s31
    %s162 = ssub.s32 %s20, %s27
    %s163 = sor.u32 %s161, %s162
    %p164 = scmp.eq.s32.totalorder %s163, 0
    %s166 = sadd.s32 %s165, 1
    %s167 = scalar_select %p164, %s165, %s166
    %p170 = pneg %p164
    %p171 = scmp.eq.s32.totalorder %s12, 1
    %p172 = por %p170, %p171
    %p173 = scmp.ne.s32.totalorder %s165, %s168
    %p174 = scmp.eq.s32.totalorder %s12, 0
    %p175 = por %p173, %p174
    %p176 = scmp.ne.s32.totalorder %s165, %s168
    %p177 = scmp.eq.s32.totalorder %s17, 1
    %p178 = por %p176, %p177
    %p179 = scmp.ne.s32.totalorder %s168, %s169
    %p180 = scmp.eq.s32.totalorder %s17, 0
    %p181 = por %p179, %p180
    %p182 = scmp.ne.s32.totalorder %s168, %s169
    %p183 = scmp.eq.s32.totalorder %s18, 1
    %p184 = por %p182, %p183
    %p186 = scmp.ne.s32.totalorder %s169, %s185
    %p187 = scmp.eq.s32.totalorder %s18, 0
    %p188 = por %p186, %p187
    %p189 = scmp.le.s32.totalorder 1, %s12
    %p190 = scmp.lt.s32.totalorder %s12, 3
    %p191 = pnand %p189, %p190
    %p192 = pneg %p191
    // Predicated region
    $region9: #{self_attention_forward.3} parent=5 // pred_check
      _
    $region10: #{self_attention_forward.3} parent=5 // pred_check_branch
      %194 = sbr.rel (%p191) target = $region12
    $region11: #{self_attention_forward.3} parent=5 // pred_region
      %s195 = ssub.s32 %s12, 1
      // Predicated region
      $region13: #{self_attention_forward.3} parent=11 // pred_check
        %p196 = pneg %p153
      $region14: #{self_attention_forward.3} parent=11 // pred_check_branch
        %198 = sbr.rel (%p196) target = $region16
      $region15: #{self_attention_forward.3} parent=11 // pred_region
        _
      $region16: #{self_attention_forward.3} parent=11 // pred_fallthru
        _
    $region12: #{self_attention_forward.3} parent=5 // pred_fallthru
      _
    %p199 = scmp.lt.s32.totalorder %s12, 2
    // Predicated region
    $region17: #{self_attention_forward.3} parent=5 // pred_check
      %p200 = pneg %p199
    $region18: #{self_attention_forward.3} parent=5 // pred_check_branch
      %202 = sbr.rel (%p200) target = $region20
    $region19: #{self_attention_forward.3} parent=5 // pred_region
      // Predicated region
      $region21: #{self_attention_forward.3} parent=19 // pred_check
        %p203 = pneg %p46
      $region22: #{self_attention_forward.3} parent=19 // pred_check_branch
        %205 = sbr.rel (%p203) target = $region24
      $region23: #{self_attention_forward.3} parent=19 // pred_region
        %s206 = smul.u32 2, %s20
        %p207 = scmp.lt.s32.totalorder %s19, 1
        %s208 = scalar_select %p207, %s19, 1
        %p209 = scmp.lt.s32.totalorder %s206, 1
        %s210 = scalar_select %p209, %s206, 1
        %s211 = smul.addr %s208, 8
        %s212 = sadd.s32 %s210, %s211
        %s213 = smul.addr %s212, 4
        %s214 = scalar_lea.vmem %s0, %s213
        %s215 = smul.u32 2, %s20
      $region24: #{self_attention_forward.3} parent=19 // pred_fallthru
        _
      // Predicated region
      $region25: #{self_attention_forward.3} parent=19 // pred_check
        %p216 = pneg %p72
      $region26: #{self_attention_forward.3} parent=19 // pred_check_branch
        %218 = sbr.rel (%p216) target = $region28
      $region27: #{self_attention_forward.3} parent=19 // pred_region
        %p219 = scmp.lt.s32.totalorder %s19, 1
        %s220 = scalar_select %p219, %s19, 1
        %s221 = smul.addr %s220, 32
        %s222 = smul.addr %s221, 4
        %s223 = scalar_lea.vmem %s1, %s222
      $region28: #{self_attention_forward.3} parent=19 // pred_fallthru
        _
      // Predicated region
      $region29: #{self_attention_forward.3} parent=19 // pred_check
        %p224 = pneg %p98
      $region30: #{self_attention_forward.3} parent=19 // pred_check_branch
        %226 = sbr.rel (%p224) target = $region32
      $region31: #{self_attention_forward.3} parent=19 // pred_region
        %p227 = scmp.lt.s32.totalorder %s19, 1
        %s228 = scalar_select %p227, %s19, 1
        %s229 = smul.addr %s228, 8
        %s230 = smul.addr %s229, 4
        %s231 = scalar_lea.vmem %s2, %s230
      $region32: #{self_attention_forward.3} parent=19 // pred_fallthru
        _
      // Predicated region
      $region33: #{self_attention_forward.3} parent=19 // pred_check
        %p232 = pneg %p126
      $region34: #{self_attention_forward.3} parent=19 // pred_check_branch
        %234 = sbr.rel (%p232) target = $region36
      $region35: #{self_attention_forward.3} parent=19 // pred_region
        %s235 = smul.u32 2, %s20
        %p236 = scmp.lt.s32.totalorder %s19, 1
        %s237 = scalar_select %p236, %s19, 1
        %p238 = scmp.lt.s32.totalorder %s235, 1
        %s239 = scalar_select %p238, %s235, 1
        %s240 = smul.addr %s237, 8
        %s241 = sadd.s32 %s239, %s240
        %s242 = smul.addr %s241, 8
        %s243 = scalar_lea.vmem %s3, %s242
        %s244 = smul.u32 2, %s20
      $region36: #{self_attention_forward.3} parent=19 // pred_fallthru
        _
    $region20: #{self_attention_forward.3} parent=5 // pred_fallthru
      _
    %p245 = scmp.le.s32.totalorder 1, %s12
    %p246 = scmp.lt.s32.totalorder %s12, 3
    %p247 = pnand %p245, %p246
    %p248 = pneg %p247
    // Predicated region
    $region37: #{self_attention_forward.3} parent=5 // pred_check
      _
    $region38: #{self_attention_forward.3} parent=5 // pred_check_branch
      %250 = sbr.rel (%p247) target = $region40
    $region39: #{self_attention_forward.3} parent=5 // pred_region
      %s251 = ssub.s32 %s12, 1
      %s252 = smul.u32 2, %s22
      %p253 = scmp.lt.s32.totalorder %s21, 1
      %s254 = scalar_select %p253, %s21, 1
      %p255 = scmp.lt.s32.totalorder %s252, 1
      %s256 = scalar_select %p255, %s252, 1
      %s257 = smul.addr %s254, 8
      %s258 = sadd.s32 %s256, %s257
      %s259 = smul.addr %s258, 4
      %s260 = scalar_lea.vmem %s0, %s259
      %p261 = pneg %p52
      %p262 = pneg %p49
      %p263 = scmp.lt.s32.totalorder %s21, 1
      %s264 = scalar_select %p263, %s21, 1
      %s265 = smul.addr %s264, 32
      %s266 = smul.addr %s265, 4
      %s267 = scalar_lea.vmem %s1, %s266
      %p268 = pneg %p78
      %p269 = pneg %p75
      %p270 = scmp.lt.s32.totalorder %s21, 1
      %s271 = scalar_select %p270, %s21, 1
      %s272 = smul.addr %s271, 8
      %s273 = smul.addr %s272, 4
      %s274 = scalar_lea.vmem %s2, %s273
      %p275 = pneg %p104
      %p276 = pneg %p101
      %s277 = smul.u32 2, %s22
      %p278 = scmp.lt.s32.totalorder %s21, 1
      %s279 = scalar_select %p278, %s21, 1
      %p280 = scmp.lt.s32.totalorder %s277, 1
      %s281 = scalar_select %p280, %s277, 1
      %s282 = smul.addr %s279, 8
      %s283 = sadd.s32 %s281, %s282
      %s284 = smul.addr %s283, 8
      %s285 = scalar_lea.vmem %s3, %s284
      %p286 = pneg %p132
      %p287 = pneg %p129
      %p288 = pneg %p153
      %p289 = pneg %p150
      %p290 = pneg %p181
      %p291 = pneg %p178
      %s292 = smul.u32 2, %s22
      %p293 = scmp.lt.s32.totalorder %s21, 1
      %s294 = scalar_select %p293, %s21, 1
      %p295 = scmp.lt.s32.totalorder %s292, 1
      %s296 = scalar_select %p295, %s292, 1
      %s297 = smul.addr %s294, 8
      %s298 = sadd.s32 %s296, %s297
      %s299 = smul.addr %s298, 8
      %s300 = scalar_lea.vmem %s5, %s299
      %s301 = smul.u32 2, %s22
      %p302 = scmp.lt.s32.totalorder %s21, 1
      %s303 = scalar_select %p302, %s21, 1
      %p304 = scmp.lt.s32.totalorder %s301, 1
      %s305 = scalar_select %p304, %s301, 1
      %s306 = smul.addr %s303, 8
      %s307 = sadd.s32 %s305, %s306
      %s308 = smul.addr %s307, 4
      %s309 = scalar_lea.vmem %s0, %s308
      %s310 = smul.u32 2, %s22
      %p311 = scmp.lt.s32.totalorder %s21, 1
      %s312 = scalar_select %p311, %s21, 1
      %s313 = smul.addr %s312, 32
      %s314 = smul.addr %s313, 4
      %s315 = scalar_lea.vmem %s1, %s314
      %p316 = scmp.lt.s32.totalorder %s21, 1
      %s317 = scalar_select %p316, %s21, 1
      %s318 = smul.addr %s317, 8
      %s319 = smul.addr %s318, 4
      %s320 = scalar_lea.vmem %s2, %s319
      %s321 = smul.u32 2, %s22
      %p322 = scmp.lt.s32.totalorder %s21, 1
      %s323 = scalar_select %p322, %s21, 1
      %p324 = scmp.lt.s32.totalorder %s321, 1
      %s325 = scalar_select %p324, %s321, 1
      %s326 = smul.addr %s323, 8
      %s327 = sadd.s32 %s325, %s326
      %s328 = smul.addr %s327, 8
      %s329 = scalar_lea.vmem %s3, %s328
      %s330 = smul.u32 2, %s22
      %s331 = smul.u32 2, %s22
      %p332 = scmp.lt.s32.totalorder %s21, 1
      %s333 = scalar_select %p332, %s21, 1
      %p334 = scmp.lt.s32.totalorder %s331, 1
      %s335 = scalar_select %p334, %s331, 1
      %s336 = smul.addr %s333, 8
      %s337 = sadd.s32 %s335, %s336
      %s338 = smul.addr %s337, 8
      %s339 = scalar_lea.vmem %s5, %s338
      %s340 = smul.u32 2, %s22
      %v342 = vld [vmem:[%s315] sm:$0xf]
      %v343 = vld [vmem:[%s315 + $0x4] sm:$0xf]
      %v344 = vld [vmem:[%s315 + $0x8] sm:$0xf]
      %v345 = vld [vmem:[%s315 + $0xc] sm:$0xf]
      %v346 = vld [vmem:[%s315 + $0x10] sm:$0xf]
      %v347 = vld [vmem:[%s315 + $0x14] sm:$0xf]
      %v348 = vld [vmem:[%s315 + $0x18] sm:$0xf]
      %v349 = vld [vmem:[%s315 + $0x1c] sm:$0xf]
      %v350 = vld [vmem:[%s315 + $0x20] sm:$0xf]
      %v351 = vld [vmem:[%s315 + $0x24] sm:$0xf]
      %v352 = vld [vmem:[%s315 + $0x28] sm:$0xf]
      %v353 = vld [vmem:[%s315 + $0x2c] sm:$0xf]
      %v354 = vld [vmem:[%s315 + $0x30] sm:$0xf]
      %v355 = vld [vmem:[%s315 + $0x34] sm:$0xf]
      %v356 = vld [vmem:[%s315 + $0x38] sm:$0xf]
      %v357 = vld [vmem:[%s315 + $0x3c] sm:$0xf]
      %v358 = vld [vmem:[%s315 + $0x40] sm:$0xf]
      %v359 = vld [vmem:[%s315 + $0x44] sm:$0xf]
      %v360 = vld [vmem:[%s315 + $0x48] sm:$0xf]
      %v361 = vld [vmem:[%s315 + $0x4c] sm:$0xf]
      %v362 = vld [vmem:[%s315 + $0x50] sm:$0xf]
      %v363 = vld [vmem:[%s315 + $0x54] sm:$0xf]
      %v364 = vld [vmem:[%s315 + $0x58] sm:$0xf]
      %v365 = vld [vmem:[%s315 + $0x5c] sm:$0xf]
      %v366 = vld [vmem:[%s315 + $0x60] sm:$0xf]
      %v367 = vld [vmem:[%s315 + $0x64] sm:$0xf]
      %v368 = vld [vmem:[%s315 + $0x68] sm:$0xf]
      %v369 = vld [vmem:[%s315 + $0x6c] sm:$0xf]
      %v370 = vld [vmem:[%s315 + $0x70] sm:$0xf]
      %v371 = vld [vmem:[%s315 + $0x74] sm:$0xf]
      %v372 = vld [vmem:[%s315 + $0x78] sm:$0xf]
      %v373 = vld [vmem:[%s315 + $0x7c] sm:$0xf]
      %v374 = vld [vmem:[%s309] sm:$0xff]
      %v375 = vld [vmem:[%s309 + $0x8] sm:$0xff]
      %v376 = vld [vmem:[%s309 + $0x10] sm:$0xff]
      %v377 = vld [vmem:[%s309 + $0x18] sm:$0xff]
      %v410 = vunpack.c.l.b16 %v342
      %v411 = vunpack.c.l.b16 %v343
      %v412 = vunpack.c.l.b16 %v344
      %v413 = vunpack.c.l.b16 %v345
      %v414 = vunpack.c.l.b16 %v346
      %v415 = vunpack.c.l.b16 %v347
      %v416 = vunpack.c.l.b16 %v348
      %v417 = vunpack.c.l.b16 %v349
      %v418 = vunpack.c.l.b16 %v350
      %v419 = vunpack.c.l.b16 %v351
      %v420 = vunpack.c.l.b16 %v352
      %v421 = vunpack.c.l.b16 %v353
      %v422 = vunpack.c.l.b16 %v354
      %v423 = vunpack.c.l.b16 %v355
      %v424 = vunpack.c.l.b16 %v356
      %v425 = vunpack.c.l.b16 %v357
      %v426 = vunpack.c.l.b16 %v358
      %v427 = vunpack.c.l.b16 %v359
      %v428 = vunpack.c.l.b16 %v360
      %v429 = vunpack.c.l.b16 %v361
      %v430 = vunpack.c.l.b16 %v362
      %v431 = vunpack.c.l.b16 %v363
      %v432 = vunpack.c.l.b16 %v364
      %v433 = vunpack.c.l.b16 %v365
      %v434 = vunpack.c.l.b16 %v366
      %v435 = vunpack.c.l.b16 %v367
      %v436 = vunpack.c.l.b16 %v368
      %v437 = vunpack.c.l.b16 %v369
      %v438 = vunpack.c.l.b16 %v370
      %v439 = vunpack.c.l.b16 %v371
      %v440 = vunpack.c.l.b16 %v372
      %v441 = vunpack.c.l.b16 %v373
      %v442 = vpack.c.b16 %v411, %v410
      %v443 = vpack.c.b16 %v413, %v412
      %v444 = vpack.c.b16 %v415, %v414
      %v445 = vpack.c.b16 %v417, %v416
      %v446 = vpack.c.b16 %v419, %v418
      %v447 = vpack.c.b16 %v421, %v420
      %v448 = vpack.c.b16 %v423, %v422
      %v449 = vpack.c.b16 %v425, %v424
      %v450 = vpack.c.b16 %v427, %v426
      %v451 = vpack.c.b16 %v429, %v428
      %v452 = vpack.c.b16 %v431, %v430
      %v453 = vpack.c.b16 %v433, %v432
      %v454 = vpack.c.b16 %v435, %v434
      %v455 = vpack.c.b16 %v437, %v436
      %v456 = vpack.c.b16 %v439, %v438
      %v457 = vpack.c.b16 %v441, %v440
      %v462 = vunpack.c.l.b16 %v374
      %v463 = vunpack.c.h.b16 %v374
      %v464 = vunpack.c.l.b16 %v375
      %v465 = vunpack.c.h.b16 %v375
      %v466 = vunpack.c.l.b16 %v376
      %v467 = vunpack.c.h.b16 %v376
      %v468 = vunpack.c.l.b16 %v377
      %v469 = vunpack.c.h.b16 %v377
      %v470 = vpack.c.b16 %v464, %v462
      %v471 = vpack.c.b16 %v465, %v463
      %v472 = vpack.c.b16 %v468, %v466
      %v473 = vpack.c.b16 %v469, %v467
      %vm478 = vcmask 261120
      %v480 = vsel %vm478, %v442, 0
      %v483 = vsel %vm478, %v443, 0
      %v486 = vsel %vm478, %v444, 0
      %v489 = vsel %vm478, %v445, 0
      %v492 = vsel %vm478, %v446, 0
      %v495 = vsel %vm478, %v447, 0
      %v498 = vsel %vm478, %v448, 0
      %v501 = vsel %vm478, %v449, 0
      %v504 = vsel %vm478, %v450, 0
      %v507 = vsel %vm478, %v451, 0
      %v510 = vsel %vm478, %v452, 0
      %v513 = vsel %vm478, %v453, 0
      %v516 = vsel %vm478, %v454, 0
      %v519 = vsel %vm478, %v455, 0
      %v522 = vsel %vm478, %v456, 0
      %v525 = vsel %vm478, %v457, 0
      %527 = vmatprep.subr.bf16.mxu0 %v471
      %528 = vmatpush1.bf16.msra.mxu0 %v470
      %529 = vmatprep.subr.bf16.mxu0 %v473
      %530 = vmatpush1.bf16.msra.mxu0 %v472
      %531 = vmatprep.subr.bf16.mxu0 0
      %532 = vmatpush1.bf16.msra.mxu0 0
      %533 = vmatprep.subr.bf16.mxu0 0
      %534 = vmatpush1.bf16.msra.mxu0 0
      %535 = vmatprep.subr.bf16.mxu0 0
      %536 = vmatpush1.bf16.msra.mxu0 0
      %537 = vmatprep.subr.bf16.mxu0 0
      %538 = vmatpush1.bf16.msra.mxu0 0
      %539 = vmatprep.subr.bf16.mxu0 0
      %540 = vmatpush1.bf16.msra.mxu0 0
      %541 = vmatprep.subr.bf16.mxu0 0
      %542 = vmatpush1.bf16.msra.mxu0 0
      %543 = vmatprep.subr.bf16.mxu0 0
      %544 = vmatpush1.bf16.msra.mxu0 0
      %545 = vmatprep.subr.bf16.mxu0 0
      %546 = vmatpush1.bf16.msra.mxu0 0
      %547 = vmatprep.subr.bf16.mxu0 0
      %548 = vmatpush1.bf16.msra.mxu0 0
      %549 = vmatprep.subr.bf16.mxu0 0
      %550 = vmatpush1.bf16.msra.mxu0 0
      %551 = vmatprep.subr.bf16.mxu0 0
      %552 = vmatpush1.bf16.msra.mxu0 0
      %553 = vmatprep.subr.bf16.mxu0 0
      %554 = vmatpush1.bf16.msra.mxu0 0
      %555 = vmatprep.subr.bf16.mxu0 0
      %556 = vmatpush1.bf16.msra.mxu0 0
      %557 = vmatprep.subr.bf16.mxu0 0
      %558 = vmatpush1.bf16.msra.mxu0 0
      %559 = vmatprep.mubr.bf16.mxu0 0
      %560 = vmatmul.mubr.bf16.gmra.mrb[0].mxu0 %v480
      %v561 = vpop.f32.mrb[0].mxu0
      %v562 = vadd.f32 0.0, %v561
      %v563 = vpop.f32.mrb[0].mxu0
      %v564 = vadd.f32 0.0, %v563
      %v565 = vpop.f32.mrb[0].mxu0
      %v566 = vadd.f32 0.0, %v565
      %v567 = vpop.f32.mrb[0].mxu0
      %v568 = vadd.f32 0.0, %v567
      %569 = vmatprep.mubr.bf16.mxu0 0
      %570 = vmatmul.mubr.bf16.gmra.mrb[0].mxu0 %v483
      %v571 = vpop.f32.mrb[0].mxu0
      %v572 = vadd.f32 0.0, %v571
      %v573 = vpop.f32.mrb[0].mxu0
      %v574 = vadd.f32 0.0, %v573
      %v575 = vpop.f32.mrb[0].mxu0
      %v576 = vadd.f32 0.0, %v575
      %v577 = vpop.f32.mrb[0].mxu0
      %v578 = vadd.f32 0.0, %v577
      %579 = vmatprep.mubr.bf16.mxu0 0
      %580 = vmatmul.mubr.bf16.gmra.mrb[0].mxu0 %v486
      %v581 = vpop.f32.mrb[0].mxu0
      %v582 = vadd.f32 0.0, %v581
      %v583 = vpop.f32.mrb[0].mxu0
      %v584 = vadd.f32 0.0, %v583
      %v585 = vpop.f32.mrb[0].mxu0
      %v586 = vadd.f32 0.0, %v585
      %v587 = vpop.f32.mrb[0].mxu0
      %v588 = vadd.f32 0.0, %v587
      %589 = vmatprep.mubr.bf16.mxu0 0
      %590 = vmatmul.mubr.bf16.gmra.mrb[0].mxu0 %v489
      %v591 = vpop.f32.mrb[0].mxu0
      %v592 = vadd.f32 0.0, %v591
      %v593 = vpop.f32.mrb[0].mxu0
      %v594 = vadd.f32 0.0, %v593
      %v595 = vpop.f32.mrb[0].mxu0
      %v596 = vadd.f32 0.0, %v595
      %v597 = vpop.f32.mrb[0].mxu0
      %v598 = vadd.f32 0.0, %v597
      %599 = vmatprep.mubr.bf16.mxu0 0
      %600 = vmatmul.mubr.bf16.gmra.mrb[0].mxu0 %v492
      %v601 = vpop.f32.mrb[0].mxu0
      %v602 = vadd.f32 0.0, %v601
      %v603 = vpop.f32.mrb[0].mxu0
      %v604 = vadd.f32 0.0, %v603
      %v605 = vpop.f32.mrb[0].mxu0
      %v606 = vadd.f32 0.0, %v605
      %v607 = vpop.f32.mrb[0].mxu0
      %v608 = vadd.f32 0.0, %v607
      %609 = vmatprep.mubr.bf16.mxu0 0
      %610 = vmatmul.mubr.bf16.gmra.mrb[0].mxu0 %v495
      %v611 = vpop.f32.mrb[0].mxu0
      %v612 = vadd.f32 0.0, %v611
      %v613 = vpop.f32.mrb[0].mxu0
      %v614 = vadd.f32 0.0, %v613
      %v615 = vpop.f32.mrb[0].mxu0
      %v616 = vadd.f32 0.0, %v615
      %v617 = vpop.f32.mrb[0].mxu0
      %v618 = vadd.f32 0.0, %v617
      %619 = vmatprep.mubr.bf16.mxu0 0
      %620 = vmatmul.mubr.bf16.gmra.mrb[0].mxu0 %v498
      %v621 = vpop.f32.mrb[0].mxu0
      %v622 = vadd.f32 0.0, %v621
      %v623 = vpop.f32.mrb[0].mxu0
      %v624 = vadd.f32 0.0, %v623
      %v625 = vpop.f32.mrb[0].mxu0
      %v626 = vadd.f32 0.0, %v625
      %v627 = vpop.f32.mrb[0].mxu0
      %v628 = vadd.f32 0.0, %v627
      %629 = vmatprep.mubr.bf16.mxu0 0
      %630 = vmatmul.mubr.bf16.gmra.mrb[0].mxu0 %v501
      %v631 = vpop.f32.mrb[0].mxu0
      %v632 = vadd.f32 0.0, %v631
      %v633 = vpop.f32.mrb[0].mxu0
      %v634 = vadd.f32 0.0, %v633
      %v635 = vpop.f32.mrb[0].mxu0
      %v636 = vadd.f32 0.0, %v635
      %v637 = vpop.f32.mrb[0].mxu0
      %v638 = vadd.f32 0.0, %v637
      %639 = vmatprep.mubr.bf16.mxu0 0
      %640 = vmatmul.mubr.bf16.gmra.mrb[0].mxu0 %v504
      %v641 = vpop.f32.mrb[0].mxu0
      %v642 = vadd.f32 0.0, %v641
      %v643 = vpop.f32.mrb[0].mxu0
      %v644 = vadd.f32 0.0, %v643
      %v645 = vpop.f32.mrb[0].mxu0
      %v646 = vadd.f32 0.0, %v645
      %v647 = vpop.f32.mrb[0].mxu0
      %v648 = vadd.f32 0.0, %v647
      %649 = vmatprep.mubr.bf16.mxu0 0
      %650 = vmatmul.mubr.bf16.gmra.mrb[0].mxu0 %v507
      %v651 = vpop.f32.mrb[0].mxu0
      %v652 = vadd.f32 0.0, %v651
      %v653 = vpop.f32.mrb[0].mxu0
      %v654 = vadd.f32 0.0, %v653
      %v655 = vpop.f32.mrb[0].mxu0
      %v656 = vadd.f32 0.0, %v655
      %v657 = vpop.f32.mrb[0].mxu0
      %v658 = vadd.f32 0.0, %v657
      %659 = vmatprep.mubr.bf16.mxu0 0
      %660 = vmatmul.mubr.bf16.gmra.mrb[0].mxu0 %v510
      %v661 = vpop.f32.mrb[0].mxu0
      %v662 = vadd.f32 0.0, %v661
      %v663 = vpop.f32.mrb[0].mxu0
      %v664 = vadd.f32 0.0, %v663
      %v665 = vpop.f32.mrb[0].mxu0
      %v666 = vadd.f32 0.0, %v665
      %v667 = vpop.f32.mrb[0].mxu0
      %v668 = vadd.f32 0.0, %v667
      %669 = vmatprep.mubr.bf16.mxu0 0
      %670 = vmatmul.mubr.bf16.gmra.mrb[0].mxu0 %v513
      %v671 = vpop.f32.mrb[0].mxu0
      %v672 = vadd.f32 0.0, %v671
      %v673 = vpop.f32.mrb[0].mxu0
      %v674 = vadd.f32 0.0, %v673
      %v675 = vpop.f32.mrb[0].mxu0
      %v676 = vadd.f32 0.0, %v675
      %v677 = vpop.f32.mrb[0].mxu0
      %v678 = vadd.f32 0.0, %v677
      %679 = vmatprep.mubr.bf16.mxu0 0
      %680 = vmatmul.mubr.bf16.gmra.mrb[0].mxu0 %v516
      %v681 = vpop.f32.mrb[0].mxu0
      %v682 = vadd.f32 0.0, %v681
      %v683 = vpop.f32.mrb[0].mxu0
      %v684 = vadd.f32 0.0, %v683
      %v685 = vpop.f32.mrb[0].mxu0
      %v686 = vadd.f32 0.0, %v685
      %v687 = vpop.f32.mrb[0].mxu0
      %v688 = vadd.f32 0.0, %v687
      %689 = vmatprep.mubr.bf16.mxu0 0
      %690 = vmatmul.mubr.bf16.gmra.mrb[0].mxu0 %v519
      %v691 = vpop.f32.mrb[0].mxu0
      %v692 = vadd.f32 0.0, %v691
      %v693 = vpop.f32.mrb[0].mxu0
      %v694 = vadd.f32 0.0, %v693
      %v695 = vpop.f32.mrb[0].mxu0
      %v696 = vadd.f32 0.0, %v695
      %v697 = vpop.f32.mrb[0].mxu0
      %v698 = vadd.f32 0.0, %v697
      %699 = vmatprep.mubr.bf16.mxu0 0
      %700 = vmatmul.mubr.bf16.gmra.mrb[0].mxu0 %v522
      %v701 = vpop.f32.mrb[0].mxu0
      %v702 = vadd.f32 0.0, %v701
      %v703 = vpop.f32.mrb[0].mxu0
      %v704 = vadd.f32 0.0, %v703
      %v705 = vpop.f32.mrb[0].mxu0
      %v706 = vadd.f32 0.0, %v705
      %v707 = vpop.f32.mrb[0].mxu0
      %v708 = vadd.f32 0.0, %v707
      %709 = vmatprep.mubr.bf16.mxu0 0
      %710 = vmatmul.mubr.bf16.gmra.mrb[0].mxu0 %v525
      %v711 = vpop.f32.mrb[0].mxu0
      %v712 = vadd.f32 0.0, %v711
      %v713 = vpop.f32.mrb[0].mxu0
      %v714 = vadd.f32 0.0, %v713
      %v715 = vpop.f32.mrb[0].mxu0
      %v716 = vadd.f32 0.0, %v715
      %v717 = vpop.f32.mrb[0].mxu0
      %v718 = vadd.f32 0.0, %v717
      %719 = vdwg.mxu0
      %v720 = vmax.f32 %v562, %v572
      %v721 = vmax.f32 %v566, %v576
      %v722 = vmax.f32 %v720, %v582
      %v723 = vmax.f32 %v721, %v586
      %v724 = vmax.f32 %v722, %v592
      %v725 = vmax.f32 %v723, %v596
      %v726 = vmax.f32 %v724, %v602
      %v727 = vmax.f32 %v725, %v606
      %v728 = vmax.f32 %v726, %v612
      %v729 = vmax.f32 %v727, %v616
      %v730 = vmax.f32 %v728, %v622
      %v731 = vmax.f32 %v729, %v626
      %v732 = vmax.f32 %v730, %v632
      %v733 = vmax.f32 %v731, %v636
      %v734 = vmax.f32 %v732, %v642
      %v735 = vmax.f32 %v733, %v646
      %v736 = vmax.f32 %v734, %v652
      %v737 = vmax.f32 %v735, %v656
      %v738 = vmax.f32 %v736, %v662
      %v739 = vmax.f32 %v737, %v666
      %v740 = vmax.f32 %v738, %v672
      %v741 = vmax.f32 %v739, %v676
      %v742 = vmax.f32 %v740, %v682
      %v743 = vmax.f32 %v741, %v686
      %v744 = vmax.f32 %v742, %v692
      %v745 = vmax.f32 %v743, %v696
      %v746 = vmax.f32 %v744, %v702
      %v747 = vmax.f32 %v745, %v706
      %v748 = vmax.f32 %v746, %v712
      %v749 = vmax.f32 %v747, %v716
      %v750 = vmax.f32 %v748, %v749
      %v751 = vrot.slane %v750, 4
      %v752 = vmax.f32 %v750, %v751
      %v753 = vrot.slane %v752, 2
      %v754 = vmax.f32 %v752, %v753
      %v755 = vrot.slane %v754, 1
      %v756 = vmax.f32 %v754, %v755
      %v757 = vmax.f32 %v564, %v574
      %v758 = vmax.f32 %v568, %v578
      %v759 = vmax.f32 %v757, %v584
      %v760 = vmax.f32 %v758, %v588
      %v761 = vmax.f32 %v759, %v594
      %v762 = vmax.f32 %v760, %v598
      %v763 = vmax.f32 %v761, %v604
      %v764 = vmax.f32 %v762, %v608
      %v765 = vmax.f32 %v763, %v614
      %v766 = vmax.f32 %v764, %v618
      %v767 = vmax.f32 %v765, %v624
      %v768 = vmax.f32 %v766, %v628
      %v769 = vmax.f32 %v767, %v634
      %v770 = vmax.f32 %v768, %v638
      %v771 = vmax.f32 %v769, %v644
      %v772 = vmax.f32 %v770, %v648
      %v773 = vmax.f32 %v771, %v654
      %v774 = vmax.f32 %v772, %v658
      %v775 = vmax.f32 %v773, %v664
      %v776 = vmax.f32 %v774, %v668
      %v777 = vmax.f32 %v775, %v674
      %v778 = vmax.f32 %v776, %v678
      %v779 = vmax.f32 %v777, %v684
      %v780 = vmax.f32 %v778, %v688
      %v781 = vmax.f32 %v779, %v694
      %v782 = vmax.f32 %v780, %v698
      %v783 = vmax.f32 %v781, %v704
      %v784 = vmax.f32 %v782, %v708
      %v785 = vmax.f32 %v783, %v714
      %v786 = vmax.f32 %v784, %v718
      %v787 = vmax.f32 %v785, %v786
      %v788 = vrot.slane %v787, 4
      %v789 = vmax.f32 %v787, %v788
      %v790 = vrot.slane %v789, 2
      %v791 = vmax.f32 %v789, %v790
      %v792 = vrot.slane %v791, 1
      %v793 = vmax.f32 %v791, %v792
      %v794 = vsub.f32 %v562, %v756
      %v795 = vsub.f32 %v564, %v793
      %v796 = vsub.f32 %v566, %v756
      %v797 = vsub.f32 %v568, %v793
      %v798 = vsub.f32 %v572, %v756
      %v799 = vsub.f32 %v574, %v793
      %v800 = vsub.f32 %v576, %v756
      %v801 = vsub.f32 %v578, %v793
      %v802 = vsub.f32 %v582, %v756
      %v803 = vsub.f32 %v584, %v793
      %v804 = vsub.f32 %v586, %v756
      %v805 = vsub.f32 %v588, %v793
      %v806 = vsub.f32 %v592, %v756
      %v807 = vsub.f32 %v594, %v793
      %v808 = vsub.f32 %v596, %v756
      %v809 = vsub.f32 %v598, %v793
      %v810 = vsub.f32 %v602, %v756
      %v811 = vsub.f32 %v604, %v793
      %v812 = vsub.f32 %v606, %v756
      %v813 = vsub.f32 %v608, %v793
      %v814 = vsub.f32 %v612, %v756
      %v815 = vsub.f32 %v614, %v793
      %v816 = vsub.f32 %v616, %v756
      %v817 = vsub.f32 %v618, %v793
      %v818 = vsub.f32 %v622, %v756
      %v819 = vsub.f32 %v624, %v793
      %v820 = vsub.f32 %v626, %v756
      %v821 = vsub.f32 %v628, %v793
      %v822 = vsub.f32 %v632, %v756
      %v823 = vsub.f32 %v634, %v793
      %v824 = vsub.f32 %v636, %v756
      %v825 = vsub.f32 %v638, %v793
      %v826 = vsub.f32 %v642, %v756
      %v827 = vsub.f32 %v644, %v793
      %v828 = vsub.f32 %v646, %v756
      %v829 = vsub.f32 %v648, %v793
      %v830 = vsub.f32 %v652, %v756
      %v831 = vsub.f32 %v654, %v793
      %v832 = vsub.f32 %v656, %v756
      %v833 = vsub.f32 %v658, %v793
      %v834 = vsub.f32 %v662, %v756
      %v835 = vsub.f32 %v664, %v793
      %v836 = vsub.f32 %v666, %v756
      %v837 = vsub.f32 %v668, %v793
      %v838 = vsub.f32 %v672, %v756
      %v839 = vsub.f32 %v674, %v793
      %v840 = vsub.f32 %v676, %v756
      %v841 = vsub.f32 %v678, %v793
      %v842 = vsub.f32 %v682, %v756
      %v843 = vsub.f32 %v684, %v793
      %v844 = vsub.f32 %v686, %v756
      %v845 = vsub.f32 %v688, %v793
      %v846 = vsub.f32 %v692, %v756
      %v847 = vsub.f32 %v694, %v793
      %v848 = vsub.f32 %v696, %v756
      %v849 = vsub.f32 %v698, %v793
      %v850 = vsub.f32 %v702, %v756
      %v851 = vsub.f32 %v704, %v793
      %v852 = vsub.f32 %v706, %v756
      %v853 = vsub.f32 %v708, %v793
      %v854 = vsub.f32 %v712, %v756
      %v855 = vsub.f32 %v714, %v793
      %v856 = vsub.f32 %v716, %v756
      %v857 = vsub.f32 %v718, %v793
      %v858 = vmul.f32 %v794, 1.442695
      %v859 = vpow.pop %v858
      %v860 = vmul.f32 %v795, 1.442695
      %v861 = vpow.pop %v860
      %v862 = vmul.f32 %v796, 1.442695
      %v863 = vpow.pop %v862
      %v864 = vmul.f32 %v797, 1.442695
      %v865 = vpow.pop %v864
      %v866 = vmul.f32 %v798, 1.442695
      %v867 = vpow.pop %v866
      %v868 = vmul.f32 %v799, 1.442695
      %v869 = vpow.pop %v868
      %v870 = vmul.f32 %v800, 1.442695
      %v871 = vpow.pop %v870
      %v872 = vmul.f32 %v801, 1.442695
      %v873 = vpow.pop %v872
      %v874 = vmul.f32 %v802, 1.442695
      %v875 = vpow.pop %v874
      %v876 = vmul.f32 %v803, 1.442695
      %v877 = vpow.pop %v876
      %v878 = vmul.f32 %v804, 1.442695
      %v879 = vpow.pop %v878
      %v880 = vmul.f32 %v805, 1.442695
      %v881 = vpow.pop %v880
      %v882 = vmul.f32 %v806, 1.442695
      %v883 = vpow.pop %v882
      %v884 = vmul.f32 %v807, 1.442695
      %v885 = vpow.pop %v884
      %v886 = vmul.f32 %v808, 1.442695
      %v887 = vpow.pop %v886
      %v888 = vmul.f32 %v809, 1.442695
      %v889 = vpow.pop %v888
      %v890 = vmul.f32 %v810, 1.442695
      %v891 = vpow.pop %v890
      %v892 = vmul.f32 %v811, 1.442695
      %v893 = vpow.pop %v892
      %v894 = vmul.f32 %v812, 1.442695
      %v895 = vpow.pop %v894
      %v896 = vmul.f32 %v813, 1.442695
      %v897 = vpow.pop %v896
      %v898 = vmul.f32 %v814, 1.442695
      %v899 = vpow.pop %v898
      %v900 = vmul.f32 %v815, 1.442695
      %v901 = vpow.pop %v900
      %v902 = vmul.f32 %v816, 1.442695
      %v903 = vpow.pop %v902
      %v904 = vmul.f32 %v817, 1.442695
      %v905 = vpow.pop %v904
      %v906 = vmul.f32 %v818, 1.442695
      %v907 = vpow.pop %v906
      %v908 = vmul.f32 %v819, 1.442695
      %v909 = vpow.pop %v908
      %v910 = vmul.f32 %v820, 1.442695
      %v911 = vpow.pop %v910
      %v912 = vmul.f32 %v821, 1.442695
      %v913 = vpow.pop %v912
      %v914 = vmul.f32 %v822, 1.442695
      %v915 = vpow.pop %v914
      %v916 = vmul.f32 %v823, 1.442695
      %v917 = vpow.pop %v916
      %v918 = vmul.f32 %v824, 1.442695
      %v919 = vpow.pop %v918
      %v920 = vmul.f32 %v825, 1.442695
      %v921 = vpow.pop %v920
      %v922 = vmul.f32 %v826, 1.442695
      %v923 = vpow.pop %v922
      %v924 = vmul.f32 %v827, 1.442695
      %v925 = vpow.pop %v924
      %v926 = vmul.f32 %v828, 1.442695
      %v927 = vpow.pop %v926
      %v928 = vmul.f32 %v829, 1.442695
      %v929 = vpow.pop %v928
      %v930 = vmul.f32 %v830, 1.442695
      %v931 = vpow.pop %v930
      %v932 = vmul.f32 %v831, 1.442695
      %v933 = vpow.pop %v932
      %v934 = vmul.f32 %v832, 1.442695
      %v935 = vpow.pop %v934
      %v936 = vmul.f32 %v833, 1.442695
      %v937 = vpow.pop %v936
      %v938 = vmul.f32 %v834, 1.442695
      %v939 = vpow.pop %v938
      %v940 = vmul.f32 %v835, 1.442695
      %v941 = vpow.pop %v940
      %v942 = vmul.f32 %v836, 1.442695
      %v943 = vpow.pop %v942
      %v944 = vmul.f32 %v837, 1.442695
      %v945 = vpow.pop %v944
      %v946 = vmul.f32 %v838, 1.442695
      %v947 = vpow.pop %v946
      %v948 = vmul.f32 %v839, 1.442695
      %v949 = vpow.pop %v948
      %v950 = vmul.f32 %v840, 1.442695
      %v951 = vpow.pop %v950
      %v952 = vmul.f32 %v841, 1.442695
      %v953 = vpow.pop %v952
      %v954 = vmul.f32 %v842, 1.442695
      %v955 = vpow.pop %v954
      %v956 = vmul.f32 %v843, 1.442695
      %v957 = vpow.pop %v956
      %v958 = vmul.f32 %v844, 1.442695
      %v959 = vpow.pop %v958
      %v960 = vmul.f32 %v845, 1.442695
      %v961 = vpow.pop %v960
      %v962 = vmul.f32 %v846, 1.442695
      %v963 = vpow.pop %v962
      %v964 = vmul.f32 %v847, 1.442695
      %v965 = vpow.pop %v964
      %v966 = vmul.f32 %v848, 1.442695
      %v967 = vpow.pop %v966
      %v968 = vmul.f32 %v849, 1.442695
      %v969 = vpow.pop %v968
      %v970 = vmul.f32 %v850, 1.442695
      %v971 = vpow.pop %v970
      %v972 = vmul.f32 %v851, 1.442695
      %v973 = vpow.pop %v972
      %v974 = vmul.f32 %v852, 1.442695
      %v975 = vpow.pop %v974
      %v976 = vmul.f32 %v853, 1.442695
      %v977 = vpow.pop %v976
      %v978 = vmul.f32 %v854, 1.442695
      %v979 = vpow.pop %v978
      %v980 = vmul.f32 %v855, 1.442695
      %v981 = vpow.pop %v980
      %v982 = vmul.f32 %v856, 1.442695
      %v983 = vpow.pop %v982
      %v984 = vmul.f32 %v857, 1.442695
      %v985 = vpow.pop %v984
      %v986 = vadd.f32 %v859, %v863
      %v987 = vadd.f32 %v986, %v867
      %v988 = vadd.f32 %v987, %v871
      %v989 = vadd.f32 %v988, %v875
      %v990 = vadd.f32 %v989, %v879
      %v991 = vadd.f32 %v990, %v883
      %v992 = vadd.f32 %v991, %v887
      %v993 = vadd.f32 %v992, %v891
      %v994 = vadd.f32 %v993, %v895
      %v995 = vadd.f32 %v994, %v899
      %v996 = vadd.f32 %v995, %v903
      %v997 = vadd.f32 %v996, %v907
      %v998 = vadd.f32 %v997, %v911
      %v999 = vadd.f32 %v998, %v915
      %v1000 = vadd.f32 %v999, %v919
      %v1001 = vadd.f32 %v1000, %v923
      %v1002 = vadd.f32 %v1001, %v927
      %v1003 = vadd.f32 %v1002, %v931
      %v1004 = vadd.f32 %v1003, %v935
      %v1005 = vadd.f32 %v1004, %v939
      %v1006 = vadd.f32 %v1005, %v943
      %v1007 = vadd.f32 %v1006, %v947
      %v1008 = vadd.f32 %v1007, %v951
      %v1009 = vadd.f32 %v1008, %v955
      %v1010 = vadd.f32 %v1009, %v959
      %v1011 = vadd.f32 %v1010, %v963
      %v1012 = vadd.f32 %v1011, %v967
      %v1013 = vadd.f32 %v1012, %v971
      %v1014 = vadd.f32 %v1013, %v975
      %v1015 = vadd.f32 %v1014, %v979
      %v1016 = vadd.f32 %v1015, %v983
      %v1017 = vrot.slane %v1016, 4
      %v1018 = vadd.f32 %v1016, %v1017
      %v1019 = vrot.slane %v1018, 2
      %v1020 = vadd.f32 %v1018, %v1019
      %v1021 = vrot.slane %v1020, 1
      %v1022 = vadd.f32 %v1020, %v1021
      %v1023 = vadd.f32 %v861, %v865
      %v1024 = vadd.f32 %v1023, %v869
      %v1025 = vadd.f32 %v1024, %v873
      %v1026 = vadd.f32 %v1025, %v877
      %v1027 = vadd.f32 %v1026, %v881
      %v1028 = vadd.f32 %v1027, %v885
      %v1029 = vadd.f32 %v1028, %v889
      %v1030 = vadd.f32 %v1029, %v893
      %v1031 = vadd.f32 %v1030, %v897
      %v1032 = vadd.f32 %v1031, %v901
      %v1033 = vadd.f32 %v1032, %v905
      %v1034 = vadd.f32 %v1033, %v909
      %v1035 = vadd.f32 %v1034, %v913
      %v1036 = vadd.f32 %v1035, %v917
      %v1037 = vadd.f32 %v1036, %v921
      %v1038 = vadd.f32 %v1037, %v925
      %v1039 = vadd.f32 %v1038, %v929
      %v1040 = vadd.f32 %v1039, %v933
      %v1041 = vadd.f32 %v1040, %v937
      %v1042 = vadd.f32 %v1041, %v941
      %v1043 = vadd.f32 %v1042, %v945
      %v1044 = vadd.f32 %v1043, %v949
      %v1045 = vadd.f32 %v1044, %v953
      %v1046 = vadd.f32 %v1045, %v957
      %v1047 = vadd.f32 %v1046, %v961
      %v1048 = vadd.f32 %v1047, %v965
      %v1049 = vadd.f32 %v1048, %v969
      %v1050 = vadd.f32 %v1049, %v973
      %v1051 = vadd.f32 %v1050, %v977
      %v1052 = vadd.f32 %v1051, %v981
      %v1053 = vadd.f32 %v1052, %v985
      %v1054 = vrot.slane %v1053, 4
      %v1055 = vadd.f32 %v1053, %v1054
      %v1056 = vrot.slane %v1055, 2
      %v1057 = vadd.f32 %v1055, %v1056
      %v1058 = vrot.slane %v1057, 1
      %v1059 = vadd.f32 %v1057, %v1058
      %v1060 = vld [vmem:[%s320] sm:$0xff]
      %v1061 = vld [vmem:[%s320 + $0x8] sm:$0xff]
      %v1062 = vld [vmem:[%s320 + $0x10] sm:$0xff]
      %v1063 = vld [vmem:[%s320 + $0x18] sm:$0xff]
      %v1064 = vpack.c.bf16 %v863, %v859
      %v1065 = vpack.c.bf16 %v865, %v861
      %v1066 = vpack.c.bf16 %v871, %v867
      %v1067 = vpack.c.bf16 %v873, %v869
      %v1068 = vpack.c.bf16 %v879, %v875
      %v1069 = vpack.c.bf16 %v881, %v877
      %v1070 = vpack.c.bf16 %v887, %v883
      %v1071 = vpack.c.bf16 %v889, %v885
      %v1072 = vpack.c.bf16 %v895, %v891
      %v1073 = vpack.c.bf16 %v897, %v893
      %v1074 = vpack.c.bf16 %v903, %v899
      %v1075 = vpack.c.bf16 %v905, %v901
      %v1076 = vpack.c.bf16 %v911, %v907
      %v1077 = vpack.c.bf16 %v913, %v909
      %v1078 = vpack.c.bf16 %v919, %v915
      %v1079 = vpack.c.bf16 %v921, %v917
      %v1080 = vpack.c.bf16 %v927, %v923
      %v1081 = vpack.c.bf16 %v929, %v925
      %v1082 = vpack.c.bf16 %v935, %v931
      %v1083 = vpack.c.bf16 %v937, %v933
      %v1084 = vpack.c.bf16 %v943, %v939
      %v1085 = vpack.c.bf16 %v945, %v941
      %v1086 = vpack.c.bf16 %v951, %v947
      %v1087 = vpack.c.bf16 %v953, %v949
      %v1088 = vpack.c.bf16 %v959, %v955
      %v1089 = vpack.c.bf16 %v961, %v957
      %v1090 = vpack.c.bf16 %v967, %v963
      %v1091 = vpack.c.bf16 %v969, %v965
      %v1092 = vpack.c.bf16 %v975, %v971
      %v1093 = vpack.c.bf16 %v977, %v973
      %v1094 = vpack.c.bf16 %v983, %v979
      %v1095 = vpack.c.bf16 %v985, %v981
      %v1100 = vunpack.c.l.b16 %v1060
      %v1101 = vunpack.c.h.b16 %v1060
      %v1102 = vunpack.c.l.b16 %v1061
      %v1103 = vunpack.c.h.b16 %v1061
      %v1104 = vunpack.c.l.b16 %v1062
      %v1105 = vunpack.c.h.b16 %v1062
      %v1106 = vunpack.c.l.b16 %v1063
      %v1107 = vunpack.c.h.b16 %v1063
      %v1108 = vpack.c.b16 %v1102, %v1100
      %v1109 = vpack.c.b16 %v1103, %v1101
      %v1110 = vpack.c.b16 %v1106, %v1104
      %v1111 = vpack.c.b16 %v1107, %v1105
      %1116 = vmatprep.subr.bf16.mxu0 %v1065
      %1117 = vmatpush1.bf16.msra.mxu0 %v1064
      %1118 = vmatprep.subr.bf16.mxu0 %v1067
      %1119 = vmatpush1.bf16.msra.mxu0 %v1066
      %1120 = vmatprep.subr.bf16.mxu0 %v1069
      %1121 = vmatpush1.bf16.msra.mxu0 %v1068
      %1122 = vmatprep.subr.bf16.mxu0 %v1071
      %1123 = vmatpush1.bf16.msra.mxu0 %v1070
      %1124 = vmatprep.subr.bf16.mxu0 %v1073
      %1125 = vmatpush1.bf16.msra.mxu0 %v1072
      %1126 = vmatprep.subr.bf16.mxu0 %v1075
      %1127 = vmatpush1.bf16.msra.mxu0 %v1074
      %1128 = vmatprep.subr.bf16.mxu0 %v1077
      %1129 = vmatpush1.bf16.msra.mxu0 %v1076
      %1130 = vmatprep.subr.bf16.mxu0 %v1079
      %1131 = vmatpush1.bf16.msra.mxu0 %v1078
      %1132 = vmatprep.subr.bf16.mxu0 %v1081
      %1133 = vmatpush1.bf16.msra.mxu0 %v1080
      %1134 = vmatprep.subr.bf16.mxu0 %v1083
      %1135 = vmatpush1.bf16.msra.mxu0 %v1082
      %1136 = vmatprep.subr.bf16.mxu0 %v1085
      %1137 = vmatpush1.bf16.msra.mxu0 %v1084
      %1138 = vmatprep.subr.bf16.mxu0 %v1087
      %1139 = vmatpush1.bf16.msra.mxu0 %v1086
      %1140 = vmatprep.subr.bf16.mxu0 %v1089
      %1141 = vmatpush1.bf16.msra.mxu0 %v1088
      %1142 = vmatprep.subr.bf16.mxu0 %v1091
      %1143 = vmatpush1.bf16.msra.mxu0 %v1090
      %1144 = vmatprep.subr.bf16.mxu0 %v1093
      %1145 = vmatpush1.bf16.msra.mxu0 %v1092
      %1146 = vmatprep.subr.bf16.mxu0 %v1095
      %1147 = vmatpush1.bf16.msra.mxu0 %v1094
      %1148 = vmatprep.mubr.bf16.mxu0 %v1109
      %1149 = vmatmul.mubr.bf16.gmra.mrb[0].mxu0 %v1108
      %v1150 = vpop.f32.mrb[0].mxu0
      %v1151 = vadd.f32 0.0, %v1150
      %v1152 = vpop.f32.mrb[0].mxu0
      %v1153 = vadd.f32 0.0, %v1152
      %v1154 = vpop.f32.mrb[0].mxu0
      %v1155 = vadd.f32 0.0, %v1154
      %v1156 = vpop.f32.mrb[0].mxu0
      %v1157 = vadd.f32 0.0, %v1156
      %1158 = vmatprep.mubr.bf16.mxu0 %v1111
      %1159 = vmatmul.mubr.bf16.gmra.mrb[0].mxu0 %v1110
      %v1160 = vpop.f32.mrb[0].mxu0
      %v1161 = vadd.f32 0.0, %v1160
      %v1162 = vpop.f32.mrb[0].mxu0
      %v1163 = vadd.f32 0.0, %v1162
      %v1164 = vpop.f32.mrb[0].mxu0
      %v1165 = vadd.f32 0.0, %v1164
      %v1166 = vpop.f32.mrb[0].mxu0
      %v1167 = vadd.f32 0.0, %v1166
      %1168 = vdwg.mxu0
      %v1169 = vrcp.pop %v1022
      %v1170 = vrcp.pop %v1059
      %v1171 = vmul.f32 %v1151, %v1169
      %v1172 = vmul.f32 %v1153, %v1170
      %v1173 = vmul.f32 %v1155, %v1169
      %v1174 = vmul.f32 %v1157, %v1170
      %v1175 = vmul.f32 %v1161, %v1169
      %v1176 = vmul.f32 %v1163, %v1170
      %v1177 = vmul.f32 %v1165, %v1169
      %v1178 = vmul.f32 %v1167, %v1170
      %s1179 = sld [smem:[#allocation2]]
      %v1180 = vstv %s1179
      %v1181 = vmul.f32 %v1180, %v1171
      %v1182 = vmul.f32 %v1180, %v1172
      %v1183 = vmul.f32 %v1180, %v1173
      %v1184 = vmul.f32 %v1180, %v1174
      %v1185 = vmul.f32 %v1180, %v1175
      %v1186 = vmul.f32 %v1180, %v1176
      %v1187 = vmul.f32 %v1180, %v1177
      %v1188 = vmul.f32 %v1180, %v1178
      %v1189 = vld [vmem:[%s329] sm:$0xff]
      %v1190 = vld [vmem:[%s329 + $0x8] sm:$0xff]
      %v1191 = vld [vmem:[%s329 + $0x10] sm:$0xff]
      %v1192 = vld [vmem:[%s329 + $0x18] sm:$0xff]
      %v1193 = vld [vmem:[%s329 + $0x20] sm:$0xff]
      %v1194 = vld [vmem:[%s329 + $0x28] sm:$0xff]
      %v1195 = vld [vmem:[%s329 + $0x30] sm:$0xff]
      %v1196 = vld [vmem:[%s329 + $0x38] sm:$0xff]
      %v1197 = vadd.f32 %v1181, %v1189
      %v1198 = vadd.f32 %v1182, %v1190
      %v1199 = vadd.f32 %v1183, %v1191
      %v1200 = vadd.f32 %v1184, %v1192
      %v1201 = vadd.f32 %v1185, %v1193
      %v1202 = vadd.f32 %v1186, %v1194
      %v1203 = vadd.f32 %v1187, %v1195
      %v1204 = vadd.f32 %v1188, %v1196
      %1205 = vst [vmem:[%s339] sm:$0xff] %v1197
      %1206 = vst [vmem:[%s339 + $0x8] sm:$0xff] %v1198
      %1207 = vst [vmem:[%s339 + $0x10] sm:$0xff] %v1199
      %1208 = vst [vmem:[%s339 + $0x18] sm:$0xff] %v1200
      %1209 = vst [vmem:[%s339 + $0x20] sm:$0xff] %v1201
      %1210 = vst [vmem:[%s339 + $0x28] sm:$0xff] %v1202
      %1211 = vst [vmem:[%s339 + $0x30] sm:$0xff] %v1203
      %1212 = vst [vmem:[%s339 + $0x38] sm:$0xff] %v1204
      %s1213 = smul.u32 2, %s22
      %p1214 = scmp.lt.s32.totalorder %s21, 1
      %s1215 = scalar_select %p1214, %s21, 1
      %p1216 = scmp.lt.s32.totalorder %s1213, 1
      %s1217 = scalar_select %p1216, %s1213, 1
      %s1218 = smul.addr %s1215, 8
      %s1219 = sadd.s32 %s1217, %s1218
      %s1220 = smul.addr %s1219, 8
      %s1221 = scalar_lea.vmem %s5, %s1220
      // Predicated region
      $region41: #{self_attention_forward.3} parent=39 // pred_check
        %p1222 = pneg %p178
      $region42: #{self_attention_forward.3} parent=39 // pred_check_branch
        %1224 = sbr.rel (%p1222) target = $region44
      $region43: #{self_attention_forward.3} parent=39 // pred_region
        %s1225 = smul.u32 2, %s22
      $region44: #{self_attention_forward.3} parent=39 // pred_fallthru
        _
    $region40: #{self_attention_forward.3} parent=5 // pred_fallthru
      _
    %p1226 = scmp.le.s32.totalorder 2, %s12
    // Predicated region
    $region45: #{self_attention_forward.3} parent=5 // pred_check
      %p1227 = pneg %p1226
    $region46: #{self_attention_forward.3} parent=5 // pred_check_branch
      %1229 = sbr.rel (%p1227) target = $region48
    $region47: #{self_attention_forward.3} parent=5 // pred_region
      %s1230 = ssub.s32 %s12, 2
      // Predicated region
      $region49: #{self_attention_forward.3} parent=47 // pred_check
        %p1231 = pneg %p184
      $region50: #{self_attention_forward.3} parent=47 // pred_check_branch
        %1233 = sbr.rel (%p1231) target = $region52
      $region51: #{self_attention_forward.3} parent=47 // pred_region
        %s1234 = smul.u32 2, %s24
        %p1235 = scmp.lt.s32.totalorder %s23, 1
        %s1236 = scalar_select %p1235, %s23, 1
        %p1237 = scmp.lt.s32.totalorder %s1234, 1
        %s1238 = scalar_select %p1237, %s1234, 1
        %s1239 = smul.addr %s1236, 8
        %s1240 = sadd.s32 %s1238, %s1239
        %s1241 = smul.addr %s1240, 8
        %s1242 = scalar_lea.vmem %s5, %s1241
      $region52: #{self_attention_forward.3} parent=47 // pred_fallthru
        _
    $region48: #{self_attention_forward.3} parent=5 // pred_fallthru
      _
  $region6: #{self_attention_forward.3} parent=0 // loop_footer
    %s16 = sadd.s32 1, %s12
  $region7: #{self_attention_forward.3} parent=0 // loop_footer_branch
    %11 = sbr.rel target = $region3
  $region8: #{self_attention_forward.3} parent=0 // loop_exit
    _

</llo_original>
